<compile_context>
chip_gen: v7x
topology: tpu7x:2x2x1
jax: 0.10.0
libtpu: 0.0.40
codegen_flags: <defaults>
</compile_context>

<pallas_src>
import jax
import jax.numpy as jnp
import numpy as np
from jax.experimental import pallas as pl
from jax.experimental.pallas import tpu as pltpu


def _mlp_kernel(x_ref, w1_ref, b1_ref, w2_ref, b2_ref, w3_ref, b3_ref, o_ref):
    # x_ref: (4, TB) f32, batch on lanes.  Weights are (out, in) f32 so each
    # layer is W @ H with the batch on the N (lane) axis of the MXU output.
    # Biases are (out, 1) f32 and broadcast across lanes.
    hi = jax.lax.Precision.HIGHEST  # exact-f32 matmuls; MXU is nowhere near the bottleneck
    x = x_ref[...]                                                      # (4, TB)

    h1 = jnp.dot(w1_ref[...], x,
                 preferred_element_type=jnp.float32, precision=hi)      # (25, TB)
    h1 = jnp.maximum(h1 + b1_ref[...], 0.0)

    h2 = jnp.dot(w2_ref[...], h1,
                 preferred_element_type=jnp.float32, precision=hi)      # (20, TB)
    h2 = jnp.maximum(h2 + b2_ref[...], 0.0)

    out = jnp.dot(w3_ref[...], h2,
                  preferred_element_type=jnp.float32, precision=hi)     # (2, TB)
    o_ref[...] = (out + b3_ref[...]).astype(o_ref.dtype)


def _round_up(n, m):
    return ((n + m - 1) // m) * m


def titanic_forward(x, params, *, tb=16384):
    """Pallas TPU forward for TitanicModel.

    x: (B, 4) float32
    params: w1 (4,25), b1 (1,25), w2 (25,20), b2 (1,20), w3 (20,2), b3 (1,2)
    returns logits: (B, 2) float32
    """
    B = x.shape[0]
    # Pad the batch (lane axis) only to a multiple of 128.
    Bp = _round_up(B, 128)
    # Cap the tile so it (a) never exceeds the padded batch and (b) yields >=2
    # tiles whenever the batch is big enough, so the "parallel" grid axis can
    # actually use both TensorCores on v7x.  tb stays a multiple of 128.
    tb = min(tb, max(128, _round_up(pl.cdiv(Bp, 2), 128)))
    grid = (pl.cdiv(Bp, tb),)   # ragged last tile is fine: OOB writes are dropped

    # Batch on lanes: (features, batch).  Pad + transpose are the only wrapper
    # layout ops; under jit they fuse into a single (cheap, 16 B/row) pass.
    xt = jnp.pad(x, ((0, Bp - B), (0, 0))).T                            # (4, Bp) f32
    w1t = params["w1"].T.astype(jnp.float32)                            # (25, 4)
    w2t = params["w2"].T.astype(jnp.float32)                            # (20, 25)
    w3t = params["w3"].T.astype(jnp.float32)                            # (2, 20)
    b1c = params["b1"].reshape(-1, 1).astype(jnp.float32)               # (25, 1)
    b2c = params["b2"].reshape(-1, 1).astype(jnp.float32)               # (20, 1)
    b3c = params["b3"].reshape(-1, 1).astype(jnp.float32)               # (2, 1)

    # Weights/biases: same block every grid step -> stay VMEM-resident.
    const = lambda a: pl.BlockSpec(a.shape, lambda i: (0, 0))

    flops = 2 * Bp * (4 * 25 + 25 * 20 + 20 * 2)
    bytes_accessed = (Bp * 4 * 4                         # x (f32)
                      + Bp * 2 * 4                       # logits (f32)
                      + (25 * 4 + 20 * 25 + 2 * 20) * 4  # weights (f32)
                      + (25 + 20 + 2) * 4)               # biases (f32)

    out_t = pl.pallas_call(
        _mlp_kernel,
        out_shape=jax.ShapeDtypeStruct((2, Bp), jnp.float32),
        grid=grid,
        in_specs=[
            pl.BlockSpec((4, tb), lambda i: (0, i)),     # x: batch-tiled, lane-dense
            const(w1t), const(b1c),
            const(w2t), const(b2c),
            const(w3t), const(b3c),
        ],
        out_specs=pl.BlockSpec((2, tb), lambda i: (0, i)),
        compiler_params=pltpu.CompilerParams(
            dimension_semantics=("parallel",),           # shard batch tiles across TCs
            vmem_limit_bytes=32 * 1024 * 1024),          # ~352*tb B/step << 32 MiB
        cost_estimate=pl.CostEstimate(flops=flops, transcendentals=0,
                                      bytes_accessed=bytes_accessed),
    )(xt, w1t, b1c, w2t, b2c, w3t, b3c)

    return out_t[:, :B].T                                               # (B, 2)


def init_params(key):
    """Deterministic init matching nn.Linear shapes (4->25->20->2)."""
    k1, k2, k3, k4, k5, k6 = jax.random.split(key, 6)

    def linear(kw, kb, fan_in, fan_out):
        bound = 1.0 / np.sqrt(fan_in)
        w = jax.random.uniform(kw, (fan_in, fan_out), jnp.float32, -bound, bound)
        b = jax.random.uniform(kb, (1, fan_out), jnp.float32, -bound, bound)
        return w, b

    w1, b1 = linear(k1, k2, 4, 25)
    w2, b2 = linear(k3, k4, 25, 20)
    w3, b3 = linear(k5, k6, 20, 2)
    return dict(w1=w1, b1=b1, w2=w2, b2=b2, w3=w3, b3=b3)


def reference_forward_f32(x, p):
    """Pure-f32 reference matching the PyTorch module semantics."""
    hi = jax.lax.Precision.HIGHEST
    dot = lambda a, b: jnp.dot(a, b, precision=hi, preferred_element_type=jnp.float32)
    h1 = jnp.maximum(dot(x, p["w1"]) + p["b1"], 0.0)
    h2 = jnp.maximum(dot(h1, p["w2"]) + p["b2"], 0.0)
    return dot(h2, p["w3"]) + p["b3"]


if __name__ == "__main__":
    key = jax.random.PRNGKey(0)
    kx, kp = jax.random.split(key)

    batch = 8
    x = jax.random.normal(kx, (batch, 4), dtype=jnp.float32)
    params = init_params(kp)

    out = jax.jit(titanic_forward)(x, params)
    out = jax.block_until_ready(out)
    assert out.shape == (batch, 2)

    ref = reference_forward_f32(x, params)
    np.testing.assert_allclose(np.asarray(out), np.asarray(ref), rtol=1e-3, atol=1e-3)

    print("KERNEL_OK")
</pallas_src>

<mosaic_0001>
module attributes {stable_mosaic.version = 11 : i64} {
  func.func @_mlp_kernel(%arg0: i32, %arg1: memref<4x128xf32, #tpu.memory_space<vmem>>, %arg2: memref<25x4xf32, #tpu.memory_space<vmem>>, %arg3: memref<25x1xf32, #tpu.memory_space<vmem>>, %arg4: memref<20x25xf32, #tpu.memory_space<vmem>>, %arg5: memref<20x1xf32, #tpu.memory_space<vmem>>, %arg6: memref<2x20xf32, #tpu.memory_space<vmem>>, %arg7: memref<2x1xf32, #tpu.memory_space<vmem>>, %arg8: memref<2x128xf32, #tpu.memory_space<vmem>>) attributes {dimension_semantics = [#tpu.dimension_semantics<parallel>], iteration_bounds = array<i64: 1>, scalar_prefetch = 0 : i64, scratch_operands = 0 : i64, tpu.core_type = #tpu.core_type<tc>, window_params = [{transform_indices = @transform_0, window_bounds = array<i64: 4, 128>}, {pipeline_mode = #tpu.pipeline_mode<synchronous>, transform_indices = @transform_1, window_bounds = array<i64: 25, 4>}, {pipeline_mode = #tpu.pipeline_mode<synchronous>, transform_indices = @transform_2, window_bounds = array<i64: 25, 1>}, {pipeline_mode = #tpu.pipeline_mode<synchronous>, transform_indices = @transform_3, window_bounds = array<i64: 20, 25>}, {pipeline_mode = #tpu.pipeline_mode<synchronous>, transform_indices = @transform_4, window_bounds = array<i64: 20, 1>}, {pipeline_mode = #tpu.pipeline_mode<synchronous>, transform_indices = @transform_5, window_bounds = array<i64: 2, 20>}, {pipeline_mode = #tpu.pipeline_mode<synchronous>, transform_indices = @transform_6, window_bounds = array<i64: 2, 1>}, {transform_indices = @transform_7, window_bounds = array<i64: 2, 128>}]} {
    %c0 = arith.constant 0 : index
    %c0_0 = arith.constant 0 : index
    %0 = vector.load %arg1[%c0, %c0_0] : memref<4x128xf32, #tpu.memory_space<vmem>>, vector<4x128xf32>
    %c0_1 = arith.constant 0 : index
    %c0_2 = arith.constant 0 : index
    %1 = vector.load %arg2[%c0_1, %c0_2] : memref<25x4xf32, #tpu.memory_space<vmem>>, vector<25x4xf32>
    %cst = arith.constant dense<0.000000e+00> : vector<25x128xf32>
    %2 = tpu.matmul %1, %0, %cst {dimension_numbers = #tpu.dot_dimension_numbers<[1], [0], [0], [1], [0, 0, 1, 1], [], []>, precision = #tpu.contract_precision<fp32>} : vector<25x4xf32>, vector<4x128xf32>, vector<25x128xf32> -> vector<25x128xf32>
    %c0_3 = arith.constant 0 : index
    %c0_4 = arith.constant 0 : index
    %3 = vector.load %arg3[%c0_3, %c0_4] : memref<25x1xf32, #tpu.memory_space<vmem>>, vector<25x1xf32>
    %4 = vector.broadcast %3 : vector<25x1xf32> to vector<25x128xf32>
    %5 = arith.addf %2, %4 : vector<25x128xf32>
    %cst_5 = arith.constant 0.000000e+00 : f32
    %6 = vector.broadcast %cst_5 : f32 to vector<25x128xf32>
    %7 = arith.maximumf %5, %6 : vector<25x128xf32>
    %c0_6 = arith.constant 0 : index
    %c0_7 = arith.constant 0 : index
    %8 = vector.load %arg4[%c0_6, %c0_7] : memref<20x25xf32, #tpu.memory_space<vmem>>, vector<20x25xf32>
    %cst_8 = arith.constant dense<0.000000e+00> : vector<20x128xf32>
    %9 = tpu.matmul %8, %7, %cst_8 {dimension_numbers = #tpu.dot_dimension_numbers<[1], [0], [0], [1], [0, 0, 1, 1], [], []>, precision = #tpu.contract_precision<fp32>} : vector<20x25xf32>, vector<25x128xf32>, vector<20x128xf32> -> vector<20x128xf32>
    %c0_9 = arith.constant 0 : index
    %c0_10 = arith.constant 0 : index
    %10 = vector.load %arg5[%c0_9, %c0_10] : memref<20x1xf32, #tpu.memory_space<vmem>>, vector<20x1xf32>
    %11 = vector.broadcast %10 : vector<20x1xf32> to vector<20x128xf32>
    %12 = arith.addf %9, %11 : vector<20x128xf32>
    %cst_11 = arith.constant 0.000000e+00 : f32
    %13 = vector.broadcast %cst_11 : f32 to vector<20x128xf32>
    %14 = arith.maximumf %12, %13 : vector<20x128xf32>
    %c0_12 = arith.constant 0 : index
    %c0_13 = arith.constant 0 : index
    %15 = vector.load %arg6[%c0_12, %c0_13] : memref<2x20xf32, #tpu.memory_space<vmem>>, vector<2x20xf32>
    %cst_14 = arith.constant dense<0.000000e+00> : vector<2x128xf32>
    %16 = tpu.matmul %15, %14, %cst_14 {dimension_numbers = #tpu.dot_dimension_numbers<[1], [0], [0], [1], [0, 0, 1, 1], [], []>, precision = #tpu.contract_precision<fp32>} : vector<2x20xf32>, vector<20x128xf32>, vector<2x128xf32> -> vector<2x128xf32>
    %c0_15 = arith.constant 0 : index
    %c0_16 = arith.constant 0 : index
    %17 = vector.load %arg7[%c0_15, %c0_16] : memref<2x1xf32, #tpu.memory_space<vmem>>, vector<2x1xf32>
    %18 = vector.broadcast %17 : vector<2x1xf32> to vector<2x128xf32>
    %19 = arith.addf %16, %18 : vector<2x128xf32>
    %c0_17 = arith.constant 0 : index
    %c0_18 = arith.constant 0 : index
    %20 = vector.load %arg8[%c0_17, %c0_18] : memref<2x128xf32, #tpu.memory_space<vmem>>, vector<2x128xf32>
    tpu.vector_store %arg8[%c0_17, %c0_18], %19 {strides = array<i32>} : memref<2x128xf32, #tpu.memory_space<vmem>>, vector<2x128xf32>,
    return
  }
  func.func @transform_0(%arg0: i32) -> (i32, i32) {
    %c0_i32 = arith.constant 0 : i32
    %c0_i32_0 = arith.constant 0 : i32
    return %c0_i32, %arg0 : i32, i32
  }
  func.func @transform_1(%arg0: i32) -> (i32, i32) {
    %c0_i32 = arith.constant 0 : i32
    %c0_i32_0 = arith.constant 0 : i32
    %c0_i32_1 = arith.constant 0 : i32
    return %c0_i32, %c0_i32_0 : i32, i32
  }
  func.func @transform_2(%arg0: i32) -> (i32, i32) {
    %c0_i32 = arith.constant 0 : i32
    %c0_i32_0 = arith.constant 0 : i32
    %c0_i32_1 = arith.constant 0 : i32
    return %c0_i32, %c0_i32_0 : i32, i32
  }
  func.func @transform_3(%arg0: i32) -> (i32, i32) {
    %c0_i32 = arith.constant 0 : i32
    %c0_i32_0 = arith.constant 0 : i32
    %c0_i32_1 = arith.constant 0 : i32
    return %c0_i32, %c0_i32_0 : i32, i32
  }
  func.func @transform_4(%arg0: i32) -> (i32, i32) {
    %c0_i32 = arith.constant 0 : i32
    %c0_i32_0 = arith.constant 0 : i32
    %c0_i32_1 = arith.constant 0 : i32
    return %c0_i32, %c0_i32_0 : i32, i32
  }
  func.func @transform_5(%arg0: i32) -> (i32, i32) {
    %c0_i32 = arith.constant 0 : i32
    %c0_i32_0 = arith.constant 0 : i32
    %c0_i32_1 = arith.constant 0 : i32
    return %c0_i32, %c0_i32_0 : i32, i32
  }
  func.func @transform_6(%arg0: i32) -> (i32, i32) {
    %c0_i32 = arith.constant 0 : i32
    %c0_i32_0 = arith.constant 0 : i32
    %c0_i32_1 = arith.constant 0 : i32
    return %c0_i32, %c0_i32_0 : i32, i32
  }
  func.func @transform_7(%arg0: i32) -> (i32, i32) {
    %c0_i32 = arith.constant 0 : i32
    %c0_i32_0 = arith.constant 0 : i32
    return %c0_i32, %arg0 : i32, i32
  }
}

</mosaic_0001>

<llo_original>
// kernel: titanic_forward.1
$region0: #{titanic_forward.1}
  #allocation0 [shape = 'u32[]', space=smem, size = 0x4, offset = 0x4, fixed_abs, tag = 'smem constant byte address 0x4 - core index']
  #allocation1 [shape = 'u32[144,128]{1,0:T(1,128)}', space=vmem, size = 0x12000, scoped, tag = 'internal scratch']
  %s0 = inlined_call_operand.vmem [shape: f32[4,128], index: 0, kind: input, shape index: {}]
  %s1 = inlined_call_operand.vmem [shape: f32[25,4], index: 1, kind: input, shape index: {}]
  %s2 = inlined_call_operand.vmem [shape: f32[25,1], index: 2, kind: input, shape index: {}]
  %s3 = inlined_call_operand.vmem [shape: f32[20,25], index: 3, kind: input, shape index: {}]
  %s4 = inlined_call_operand.vmem [shape: f32[20,1], index: 4, kind: input, shape index: {}]
  %s5 = inlined_call_operand.vmem [shape: f32[2,20], index: 5, kind: input, shape index: {}]
  %s6 = inlined_call_operand.vmem [shape: f32[2,1], index: 6, kind: input, shape index: {}]
  %s7 = inlined_call_operand.vmem [shape: f32[2,128], index: 7, kind: output, shape index: {}]
  %s8 = sld [smem:[#allocation0]]
  $region38: #{titanic_forward.1} parent=0
    _
  %s10 = ssub.s32 1, %s8
  %s11 = scalar_select 0, %s10, %s8
  // Predicated region
  $region2: #{titanic_forward.1} parent=0 // pred_check
    _
  $region3: #{titanic_forward.1} parent=0 // pred_check_branch
    %13 = sbr.rel (0) target = $region5
  $region4: #{titanic_forward.1} parent=0 // pred_region
    _
  $region5: #{titanic_forward.1} parent=0 // pred_fallthru
    _
  // Predicated region
  $region6: #{titanic_forward.1} parent=0 // pred_check
    _
  $region7: #{titanic_forward.1} parent=0 // pred_check_branch
    %15 = sbr.rel (0) target = $region9
  $region8: #{titanic_forward.1} parent=0 // pred_region
    _
  $region9: #{titanic_forward.1} parent=0 // pred_fallthru
    _
  // Predicated region
  $region10: #{titanic_forward.1} parent=0 // pred_check
    _
  $region11: #{titanic_forward.1} parent=0 // pred_check_branch
    %17 = sbr.rel (0) target = $region13
  $region12: #{titanic_forward.1} parent=0 // pred_region
    _
  $region13: #{titanic_forward.1} parent=0 // pred_fallthru
    _
  // Predicated region
  $region14: #{titanic_forward.1} parent=0 // pred_check
    _
  $region15: #{titanic_forward.1} parent=0 // pred_check_branch
    %19 = sbr.rel (0) target = $region17
  $region16: #{titanic_forward.1} parent=0 // pred_region
    _
  $region17: #{titanic_forward.1} parent=0 // pred_fallthru
    _
  // Predicated region
  $region18: #{titanic_forward.1} parent=0 // pred_check
    _
  $region19: #{titanic_forward.1} parent=0 // pred_check_branch
    %21 = sbr.rel (0) target = $region21
  $region20: #{titanic_forward.1} parent=0 // pred_region
    _
  $region21: #{titanic_forward.1} parent=0 // pred_fallthru
    _
  // Predicated region
  $region22: #{titanic_forward.1} parent=0 // pred_check
    _
  $region23: #{titanic_forward.1} parent=0 // pred_check_branch
    %23 = sbr.rel (0) target = $region25
  $region24: #{titanic_forward.1} parent=0 // pred_region
    _
  $region25: #{titanic_forward.1} parent=0 // pred_fallthru
    _
  // Predicated region
  $region26: #{titanic_forward.1} parent=0 // pred_check
    _
  $region27: #{titanic_forward.1} parent=0 // pred_check_branch
    %25 = sbr.rel (0) target = $region29
  $region28: #{titanic_forward.1} parent=0 // pred_region
    _
  $region29: #{titanic_forward.1} parent=0 // pred_fallthru
    _
  %v26 = vld [vmem:[%s0] sm:$0xf]
  %v27 = vld [vmem:[%s1] sm:$0xff]
  %v28 = vld [vmem:[%s1 + $0x8] sm:$0xff]
  %v29 = vld [vmem:[%s1 + $0x10] sm:$0xff]
  %v30 = vld [vmem:[%s1 + $0x18] sm:$0x1]
  %v31 = vld [vmem:[%s2] sm:$0xff]
  %v32 = vld [vmem:[%s2 + $0x8] sm:$0xff]
  %v33 = vld [vmem:[%s2 + $0x10] sm:$0xff]
  %v34 = vld [vmem:[%s2 + $0x18] sm:$0x1]
  %36 = vset.pattern.permute.xlu0 0
  %37 = vperm.xlu0 %36, %v31
  %v38 = vpop.permute.xlu0 %37
  %41 = vset.pattern.permute.xlu0 0
  %42 = vperm.xlu0 %41, %v32
  %v43 = vpop.permute.xlu0 %42
  %46 = vset.pattern.permute.xlu0 0
  %47 = vperm.xlu0 %46, %v33
  %v48 = vpop.permute.xlu0 %47
  %51 = vset.pattern.permute.xlu0 0
  %52 = vperm.xlu0 %51, %v34
  %v53 = vpop.permute.xlu0 %52
  %vm55 = vcmask 31744
  %v57 = vsel %vm55, %v27, 0
  %v60 = vsel %vm55, %v28, 0
  %v63 = vsel %vm55, %v29, 0
  %v66 = vsel %vm55, %v30, 0
  %vm68 = vcmask 1043456
  %v70 = vsel %vm68, %v26, 0
  %72 = vmatprep.subr.mxu0 0.0
  %v73 = vand.u32 %v70, 4294901760
  %74 = vmatpush1.msra.mxu0 %v73
  %75 = vmatprep.subr.mxu0 0.0
  %76 = vmatpush1.msra.mxu0 0.0
  %77 = vmatprep.subr.mxu0 0.0
  %78 = vmatpush1.msra.mxu0 0.0
  %79 = vmatprep.subr.mxu0 0.0
  %80 = vmatpush1.msra.mxu0 0.0
  %81 = vmatprep.subr.mxu0 0.0
  %82 = vmatpush1.msra.mxu0 0.0
  %83 = vmatprep.subr.mxu0 0.0
  %84 = vmatpush1.msra.mxu0 0.0
  %85 = vmatprep.subr.mxu0 0.0
  %86 = vmatpush1.msra.mxu0 0.0
  %87 = vmatprep.subr.mxu0 0.0
  %88 = vmatpush1.msra.mxu0 0.0
  %89 = vmatprep.subr.mxu0 0.0
  %90 = vmatpush1.msra.mxu0 0.0
  %91 = vmatprep.subr.mxu0 0.0
  %92 = vmatpush1.msra.mxu0 0.0
  %93 = vmatprep.subr.mxu0 0.0
  %94 = vmatpush1.msra.mxu0 0.0
  %95 = vmatprep.subr.mxu0 0.0
  %96 = vmatpush1.msra.mxu0 0.0
  %97 = vmatprep.subr.mxu0 0.0
  %98 = vmatpush1.msra.mxu0 0.0
  %99 = vmatprep.subr.mxu0 0.0
  %100 = vmatpush1.msra.mxu0 0.0
  %101 = vmatprep.subr.mxu0 0.0
  %102 = vmatpush1.msra.mxu0 0.0
  %103 = vmatprep.subr.mxu0 0.0
  %104 = vmatpush1.msra.mxu0 0.0
  %105 = vmatprep.subr.mxu0 0.0
  %106 = vmatpush1.msra.mxu0 0.0
  %107 = vmatprep.subr.mxu0 0.0
  %108 = vmatpush1.msra.mxu0 0.0
  %109 = vmatprep.subr.mxu0 0.0
  %110 = vmatpush1.msra.mxu0 0.0
  %111 = vmatprep.subr.mxu0 0.0
  %112 = vmatpush1.msra.mxu0 0.0
  %113 = vmatprep.subr.mxu0 0.0
  %114 = vmatpush1.msra.mxu0 0.0
  %115 = vmatprep.subr.mxu0 0.0
  %116 = vmatpush1.msra.mxu0 0.0
  %117 = vmatprep.subr.mxu0 0.0
  %118 = vmatpush1.msra.mxu0 0.0
  %119 = vmatprep.subr.mxu0 0.0
  %120 = vmatpush1.msra.mxu0 0.0
  %121 = vmatprep.subr.mxu0 0.0
  %122 = vmatpush1.msra.mxu0 0.0
  %123 = vmatprep.subr.mxu0 0.0
  %124 = vmatpush1.msra.mxu0 0.0
  %125 = vmatprep.subr.mxu0 0.0
  %126 = vmatpush1.msra.mxu0 0.0
  %127 = vmatprep.subr.mxu0 0.0
  %128 = vmatpush1.msra.mxu0 0.0
  %129 = vmatprep.subr.mxu0 0.0
  %130 = vmatpush1.msra.mxu0 0.0
  %131 = vmatprep.subr.mxu0 0.0
  %132 = vmatpush1.msra.mxu0 0.0
  %133 = vmatprep.subr.mxu0 0.0
  %134 = vmatpush1.msra.mxu0 0.0
  %135 = vmatprep.subr.mxu0 0.0
  %136 = vmatpush1.msra.mxu0 0.0
  %137 = vmatprep.mubr.f32.mxu0 0.0
  %v138 = vand.u32 %v57, 4294901760
  %v139 = vsub.f32 %v57, %v138
  %v140 = vand.u32 %v139, 4294901760
  %v141 = vsub.f32 %v139, %v140
  %v142 = vand.u32 %v141, 4294901760
  %143 = vmatmul.mubr.f32.gmra.mrb[0].mxu0 %v142
  %v144 = vpop.f32.mrb[0].mxu0
  %v145 = vadd.f32 %v38, %v144
  %v146 = vpop.f32.mrb[0].mxu0
  %147 = vmatprep.mubr.f32.mxu0 0.0
  %v148 = vand.u32 %v60, 4294901760
  %v149 = vsub.f32 %v60, %v148
  %v150 = vand.u32 %v149, 4294901760
  %v151 = vsub.f32 %v149, %v150
  %v152 = vand.u32 %v151, 4294901760
  %153 = vmatmul.mubr.f32.gmra.mrb[0].mxu0 %v152
  %v154 = vpop.f32.mrb[0].mxu0
  %v155 = vadd.f32 %v43, %v154
  %v156 = vpop.f32.mrb[0].mxu0
  %157 = vmatprep.mubr.f32.mxu0 0.0
  %v158 = vand.u32 %v63, 4294901760
  %v159 = vsub.f32 %v63, %v158
  %v160 = vand.u32 %v159, 4294901760
  %v161 = vsub.f32 %v159, %v160
  %v162 = vand.u32 %v161, 4294901760
  %163 = vmatmul.mubr.f32.gmra.mrb[0].mxu0 %v162
  %v164 = vpop.f32.mrb[0].mxu0
  %v165 = vadd.f32 %v48, %v164
  %v166 = vpop.f32.mrb[0].mxu0
  %167 = vmatprep.mubr.f32.mxu0 0.0
  %v168 = vand.u32 %v66, 4294901760
  %v169 = vsub.f32 %v66, %v168
  %v170 = vand.u32 %v169, 4294901760
  %v171 = vsub.f32 %v169, %v170
  %v172 = vand.u32 %v171, 4294901760
  %173 = vmatmul.mubr.f32.gmra.mrb[0].mxu0 %v172
  %v174 = vpop.f32.mrb[0].mxu0
  %v175 = vadd.f32 %v53, %v174
  %v176 = vpop.f32.mrb[0].mxu0
  %177 = vdwg.mxu0
  %178 = vmatprep.subr.mxu0 0.0
  %v179 = vand.u32 %v70, 4294901760
  %v180 = vsub.f32 %v70, %v179
  %v181 = vand.u32 %v180, 4294901760
  %v182 = vsub.f32 %v180, %v181
  %v183 = vand.u32 %v182, 4294901760
  %184 = vmatpush1.msra.mxu0 %v183
  %185 = vmatprep.subr.mxu0 0.0
  %186 = vmatpush1.msra.mxu0 0.0
  %187 = vmatprep.subr.mxu0 0.0
  %188 = vmatpush1.msra.mxu0 0.0
  %189 = vmatprep.subr.mxu0 0.0
  %190 = vmatpush1.msra.mxu0 0.0
  %191 = vmatprep.subr.mxu0 0.0
  %192 = vmatpush1.msra.mxu0 0.0
  %193 = vmatprep.subr.mxu0 0.0
  %194 = vmatpush1.msra.mxu0 0.0
  %195 = vmatprep.subr.mxu0 0.0
  %196 = vmatpush1.msra.mxu0 0.0
  %197 = vmatprep.subr.mxu0 0.0
  %198 = vmatpush1.msra.mxu0 0.0
  %199 = vmatprep.subr.mxu0 0.0
  %200 = vmatpush1.msra.mxu0 0.0
  %201 = vmatprep.subr.mxu0 0.0
  %202 = vmatpush1.msra.mxu0 0.0
  %203 = vmatprep.subr.mxu0 0.0
  %204 = vmatpush1.msra.mxu0 0.0
  %205 = vmatprep.subr.mxu0 0.0
  %206 = vmatpush1.msra.mxu0 0.0
  %207 = vmatprep.subr.mxu0 0.0
  %208 = vmatpush1.msra.mxu0 0.0
  %209 = vmatprep.subr.mxu0 0.0
  %210 = vmatpush1.msra.mxu0 0.0
  %211 = vmatprep.subr.mxu0 0.0
  %212 = vmatpush1.msra.mxu0 0.0
  %213 = vmatprep.subr.mxu0 0.0
  %214 = vmatpush1.msra.mxu0 0.0
  %215 = vmatprep.subr.mxu0 0.0
  %216 = vmatpush1.msra.mxu0 0.0
  %217 = vmatprep.subr.mxu0 0.0
  %218 = vmatpush1.msra.mxu0 0.0
  %219 = vmatprep.subr.mxu0 0.0
  %220 = vmatpush1.msra.mxu0 0.0
  %221 = vmatprep.subr.mxu0 0.0
  %222 = vmatpush1.msra.mxu0 0.0
  %223 = vmatprep.subr.mxu0 0.0
  %224 = vmatpush1.msra.mxu0 0.0
  %225 = vmatprep.subr.mxu0 0.0
  %226 = vmatpush1.msra.mxu0 0.0
  %227 = vmatprep.subr.mxu0 0.0
  %228 = vmatpush1.msra.mxu0 0.0
  %229 = vmatprep.subr.mxu0 0.0
  %230 = vmatpush1.msra.mxu0 0.0
  %231 = vmatprep.subr.mxu0 0.0
  %232 = vmatpush1.msra.mxu0 0.0
  %233 = vmatprep.subr.mxu0 0.0
  %234 = vmatpush1.msra.mxu0 0.0
  %235 = vmatprep.subr.mxu0 0.0
  %236 = vmatpush1.msra.mxu0 0.0
  %237 = vmatprep.subr.mxu0 0.0
  %238 = vmatpush1.msra.mxu0 0.0
  %239 = vmatprep.subr.mxu0 0.0
  %240 = vmatpush1.msra.mxu0 0.0
  %241 = vmatprep.subr.mxu0 0.0
  %242 = vmatpush1.msra.mxu0 0.0
  %243 = vmatprep.subr.mxu0 0.0
  %244 = vmatpush1.msra.mxu0 0.0
  %245 = vmatprep.subr.mxu0 0.0
  %246 = vmatpush1.msra.mxu0 0.0
  %247 = vmatprep.mubr.f32.mxu0 0.0
  %v248 = vand.u32 %v57, 4294901760
  %249 = vmatmul.mubr.f32.gmra.mrb[0].mxu0 %v248
  %v250 = vpop.f32.mrb[0].mxu0
  %v251 = vadd.f32 %v145, %v250
  %v252 = vpop.f32.mrb[0].mxu0
  %253 = vmatprep.mubr.f32.mxu0 0.0
  %v254 = vand.u32 %v60, 4294901760
  %255 = vmatmul.mubr.f32.gmra.mrb[0].mxu0 %v254
  %v256 = vpop.f32.mrb[0].mxu0
  %v257 = vadd.f32 %v155, %v256
  %v258 = vpop.f32.mrb[0].mxu0
  %259 = vmatprep.mubr.f32.mxu0 0.0
  %v260 = vand.u32 %v63, 4294901760
  %261 = vmatmul.mubr.f32.gmra.mrb[0].mxu0 %v260
  %v262 = vpop.f32.mrb[0].mxu0
  %v263 = vadd.f32 %v165, %v262
  %v264 = vpop.f32.mrb[0].mxu0
  %265 = vmatprep.mubr.f32.mxu0 0.0
  %v266 = vand.u32 %v66, 4294901760
  %267 = vmatmul.mubr.f32.gmra.mrb[0].mxu0 %v266
  %v268 = vpop.f32.mrb[0].mxu0
  %v269 = vadd.f32 %v175, %v268
  %v270 = vpop.f32.mrb[0].mxu0
  %271 = vdwg.mxu0
  %272 = vmatprep.subr.mxu0 0.0
  %v273 = vand.u32 %v70, 4294901760
  %v274 = vsub.f32 %v70, %v273
  %275 = vmatpush1.msra.mxu0 %v274
  %276 = vmatprep.subr.mxu0 0.0
  %277 = vmatpush1.msra.mxu0 0.0
  %278 = vmatprep.subr.mxu0 0.0
  %279 = vmatpush1.msra.mxu0 0.0
  %280 = vmatprep.subr.mxu0 0.0
  %281 = vmatpush1.msra.mxu0 0.0
  %282 = vmatprep.subr.mxu0 0.0
  %283 = vmatpush1.msra.mxu0 0.0
  %284 = vmatprep.subr.mxu0 0.0
  %285 = vmatpush1.msra.mxu0 0.0
  %286 = vmatprep.subr.mxu0 0.0
  %287 = vmatpush1.msra.mxu0 0.0
  %288 = vmatprep.subr.mxu0 0.0
  %289 = vmatpush1.msra.mxu0 0.0
  %290 = vmatprep.subr.mxu0 0.0
  %291 = vmatpush1.msra.mxu0 0.0
  %292 = vmatprep.subr.mxu0 0.0
  %293 = vmatpush1.msra.mxu0 0.0
  %294 = vmatprep.subr.mxu0 0.0
  %295 = vmatpush1.msra.mxu0 0.0
  %296 = vmatprep.subr.mxu0 0.0
  %297 = vmatpush1.msra.mxu0 0.0
  %298 = vmatprep.subr.mxu0 0.0
  %299 = vmatpush1.msra.mxu0 0.0
  %300 = vmatprep.subr.mxu0 0.0
  %301 = vmatpush1.msra.mxu0 0.0
  %302 = vmatprep.subr.mxu0 0.0
  %303 = vmatpush1.msra.mxu0 0.0
  %304 = vmatprep.subr.mxu0 0.0
  %305 = vmatpush1.msra.mxu0 0.0
  %306 = vmatprep.subr.mxu0 0.0
  %307 = vmatpush1.msra.mxu0 0.0
  %308 = vmatprep.subr.mxu0 0.0
  %309 = vmatpush1.msra.mxu0 0.0
  %310 = vmatprep.subr.mxu0 0.0
  %311 = vmatpush1.msra.mxu0 0.0
  %312 = vmatprep.subr.mxu0 0.0
  %313 = vmatpush1.msra.mxu0 0.0
  %314 = vmatprep.subr.mxu0 0.0
  %315 = vmatpush1.msra.mxu0 0.0
  %316 = vmatprep.subr.mxu0 0.0
  %317 = vmatpush1.msra.mxu0 0.0
  %318 = vmatprep.subr.mxu0 0.0
  %319 = vmatpush1.msra.mxu0 0.0
  %320 = vmatprep.subr.mxu0 0.0
  %321 = vmatpush1.msra.mxu0 0.0
  %322 = vmatprep.subr.mxu0 0.0
  %323 = vmatpush1.msra.mxu0 0.0
  %324 = vmatprep.subr.mxu0 0.0
  %325 = vmatpush1.msra.mxu0 0.0
  %326 = vmatprep.subr.mxu0 0.0
  %327 = vmatpush1.msra.mxu0 0.0
  %328 = vmatprep.subr.mxu0 0.0
  %329 = vmatpush1.msra.mxu0 0.0
  %330 = vmatprep.subr.mxu0 0.0
  %331 = vmatpush1.msra.mxu0 0.0
  %332 = vmatprep.subr.mxu0 0.0
  %333 = vmatpush1.msra.mxu0 0.0
  %334 = vmatprep.subr.mxu0 0.0
  %335 = vmatpush1.msra.mxu0 0.0
  %336 = vmatprep.subr.mxu0 0.0
  %337 = vmatpush1.msra.mxu0 0.0
  %338 = vmatprep.mubr.f32.mxu0 0.0
  %v339 = vand.u32 %v57, 4294901760
  %v340 = vsub.f32 %v57, %v339
  %341 = vmatmul.mubr.f32.gmra.mrb[0].mxu0 %v340
  %v342 = vpop.f32.mrb[0].mxu0
  %v343 = vadd.f32 %v251, %v342
  %v344 = vpop.f32.mrb[0].mxu0
  %345 = vmatprep.mubr.f32.mxu0 0.0
  %v346 = vand.u32 %v60, 4294901760
  %v347 = vsub.f32 %v60, %v346
  %348 = vmatmul.mubr.f32.gmra.mrb[0].mxu0 %v347
  %v349 = vpop.f32.mrb[0].mxu0
  %v350 = vadd.f32 %v257, %v349
  %v351 = vpop.f32.mrb[0].mxu0
  %352 = vmatprep.mubr.f32.mxu0 0.0
  %v353 = vand.u32 %v63, 4294901760
  %v354 = vsub.f32 %v63, %v353
  %355 = vmatmul.mubr.f32.gmra.mrb[0].mxu0 %v354
  %v356 = vpop.f32.mrb[0].mxu0
  %v357 = vadd.f32 %v263, %v356
  %v358 = vpop.f32.mrb[0].mxu0
  %359 = vmatprep.mubr.f32.mxu0 0.0
  %v360 = vand.u32 %v66, 4294901760
  %v361 = vsub.f32 %v66, %v360
  %362 = vmatmul.mubr.f32.gmra.mrb[0].mxu0 %v361
  %v363 = vpop.f32.mrb[0].mxu0
  %v364 = vadd.f32 %v269, %v363
  %v365 = vpop.f32.mrb[0].mxu0
  %366 = vdwg.mxu0
  %367 = vmatprep.subr.mxu0 0.0
  %v368 = vand.u32 %v70, 4294901760
  %369 = vmatpush1.msra.mxu0 %v368
  %370 = vmatprep.subr.mxu0 0.0
  %371 = vmatpush1.msra.mxu0 0.0
  %372 = vmatprep.subr.mxu0 0.0
  %373 = vmatpush1.msra.mxu0 0.0
  %374 = vmatprep.subr.mxu0 0.0
  %375 = vmatpush1.msra.mxu0 0.0
  %376 = vmatprep.subr.mxu0 0.0
  %377 = vmatpush1.msra.mxu0 0.0
  %378 = vmatprep.subr.mxu0 0.0
  %379 = vmatpush1.msra.mxu0 0.0
  %380 = vmatprep.subr.mxu0 0.0
  %381 = vmatpush1.msra.mxu0 0.0
  %382 = vmatprep.subr.mxu0 0.0
  %383 = vmatpush1.msra.mxu0 0.0
  %384 = vmatprep.subr.mxu0 0.0
  %385 = vmatpush1.msra.mxu0 0.0
  %386 = vmatprep.subr.mxu0 0.0
  %387 = vmatpush1.msra.mxu0 0.0
  %388 = vmatprep.subr.mxu0 0.0
  %389 = vmatpush1.msra.mxu0 0.0
  %390 = vmatprep.subr.mxu0 0.0
  %391 = vmatpush1.msra.mxu0 0.0
  %392 = vmatprep.subr.mxu0 0.0
  %393 = vmatpush1.msra.mxu0 0.0
  %394 = vmatprep.subr.mxu0 0.0
  %395 = vmatpush1.msra.mxu0 0.0
  %396 = vmatprep.subr.mxu0 0.0
  %397 = vmatpush1.msra.mxu0 0.0
  %398 = vmatprep.subr.mxu0 0.0
  %399 = vmatpush1.msra.mxu0 0.0
  %400 = vmatprep.subr.mxu0 0.0
  %401 = vmatpush1.msra.mxu0 0.0
  %402 = vmatprep.subr.mxu0 0.0
  %403 = vmatpush1.msra.mxu0 0.0
  %404 = vmatprep.subr.mxu0 0.0
  %405 = vmatpush1.msra.mxu0 0.0
  %406 = vmatprep.subr.mxu0 0.0
  %407 = vmatpush1.msra.mxu0 0.0
  %408 = vmatprep.subr.mxu0 0.0
  %409 = vmatpush1.msra.mxu0 0.0
  %410 = vmatprep.subr.mxu0 0.0
  %411 = vmatpush1.msra.mxu0 0.0
  %412 = vmatprep.subr.mxu0 0.0
  %413 = vmatpush1.msra.mxu0 0.0
  %414 = vmatprep.subr.mxu0 0.0
  %415 = vmatpush1.msra.mxu0 0.0
  %416 = vmatprep.subr.mxu0 0.0
  %417 = vmatpush1.msra.mxu0 0.0
  %418 = vmatprep.subr.mxu0 0.0
  %419 = vmatpush1.msra.mxu0 0.0
  %420 = vmatprep.subr.mxu0 0.0
  %421 = vmatpush1.msra.mxu0 0.0
  %422 = vmatprep.subr.mxu0 0.0
  %423 = vmatpush1.msra.mxu0 0.0
  %424 = vmatprep.subr.mxu0 0.0
  %425 = vmatpush1.msra.mxu0 0.0
  %426 = vmatprep.subr.mxu0 0.0
  %427 = vmatpush1.msra.mxu0 0.0
  %428 = vmatprep.subr.mxu0 0.0
  %429 = vmatpush1.msra.mxu0 0.0
  %430 = vmatprep.subr.mxu0 0.0
  %431 = vmatpush1.msra.mxu0 0.0
  %432 = vmatprep.mubr.f32.mxu0 0.0
  %v433 = vand.u32 %v57, 4294901760
  %v434 = vsub.f32 %v57, %v433
  %v435 = vand.u32 %v434, 4294901760
  %436 = vmatmul.mubr.f32.gmra.mrb[0].mxu0 %v435
  %v437 = vpop.f32.mrb[0].mxu0
  %v438 = vadd.f32 %v343, %v437
  %v439 = vpop.f32.mrb[0].mxu0
  %440 = vmatprep.mubr.f32.mxu0 0.0
  %v441 = vand.u32 %v60, 4294901760
  %v442 = vsub.f32 %v60, %v441
  %v443 = vand.u32 %v442, 4294901760
  %444 = vmatmul.mubr.f32.gmra.mrb[0].mxu0 %v443
  %v445 = vpop.f32.mrb[0].mxu0
  %v446 = vadd.f32 %v350, %v445
  %v447 = vpop.f32.mrb[0].mxu0
  %448 = vmatprep.mubr.f32.mxu0 0.0
  %v449 = vand.u32 %v63, 4294901760
  %v450 = vsub.f32 %v63, %v449
  %v451 = vand.u32 %v450, 4294901760
  %452 = vmatmul.mubr.f32.gmra.mrb[0].mxu0 %v451
  %v453 = vpop.f32.mrb[0].mxu0
  %v454 = vadd.f32 %v357, %v453
  %v455 = vpop.f32.mrb[0].mxu0
  %456 = vmatprep.mubr.f32.mxu0 0.0
  %v457 = vand.u32 %v66, 4294901760
  %v458 = vsub.f32 %v66, %v457
  %v459 = vand.u32 %v458, 4294901760
  %460 = vmatmul.mubr.f32.gmra.mrb[0].mxu0 %v459
  %v461 = vpop.f32.mrb[0].mxu0
  %v462 = vadd.f32 %v364, %v461
  %v463 = vpop.f32.mrb[0].mxu0
  %464 = vdwg.mxu0
  %465 = vmatprep.subr.mxu0 0.0
  %v466 = vand.u32 %v70, 4294901760
  %v467 = vsub.f32 %v70, %v466
  %v468 = vand.u32 %v467, 4294901760
  %469 = vmatpush1.msra.mxu0 %v468
  %470 = vmatprep.subr.mxu0 0.0
  %471 = vmatpush1.msra.mxu0 0.0
  %472 = vmatprep.subr.mxu0 0.0
  %473 = vmatpush1.msra.mxu0 0.0
  %474 = vmatprep.subr.mxu0 0.0
  %475 = vmatpush1.msra.mxu0 0.0
  %476 = vmatprep.subr.mxu0 0.0
  %477 = vmatpush1.msra.mxu0 0.0
  %478 = vmatprep.subr.mxu0 0.0
  %479 = vmatpush1.msra.mxu0 0.0
  %480 = vmatprep.subr.mxu0 0.0
  %481 = vmatpush1.msra.mxu0 0.0
  %482 = vmatprep.subr.mxu0 0.0
  %483 = vmatpush1.msra.mxu0 0.0
  %484 = vmatprep.subr.mxu0 0.0
  %485 = vmatpush1.msra.mxu0 0.0
  %486 = vmatprep.subr.mxu0 0.0
  %487 = vmatpush1.msra.mxu0 0.0
  %488 = vmatprep.subr.mxu0 0.0
  %489 = vmatpush1.msra.mxu0 0.0
  %490 = vmatprep.subr.mxu0 0.0
  %491 = vmatpush1.msra.mxu0 0.0
  %492 = vmatprep.subr.mxu0 0.0
  %493 = vmatpush1.msra.mxu0 0.0
  %494 = vmatprep.subr.mxu0 0.0
  %495 = vmatpush1.msra.mxu0 0.0
  %496 = vmatprep.subr.mxu0 0.0
  %497 = vmatpush1.msra.mxu0 0.0
  %498 = vmatprep.subr.mxu0 0.0
  %499 = vmatpush1.msra.mxu0 0.0
  %500 = vmatprep.subr.mxu0 0.0
  %501 = vmatpush1.msra.mxu0 0.0
  %502 = vmatprep.subr.mxu0 0.0
  %503 = vmatpush1.msra.mxu0 0.0
  %504 = vmatprep.subr.mxu0 0.0
  %505 = vmatpush1.msra.mxu0 0.0
  %506 = vmatprep.subr.mxu0 0.0
  %507 = vmatpush1.msra.mxu0 0.0
  %508 = vmatprep.subr.mxu0 0.0
  %509 = vmatpush1.msra.mxu0 0.0
  %510 = vmatprep.subr.mxu0 0.0
  %511 = vmatpush1.msra.mxu0 0.0
  %512 = vmatprep.subr.mxu0 0.0
  %513 = vmatpush1.msra.mxu0 0.0
  %514 = vmatprep.subr.mxu0 0.0
  %515 = vmatpush1.msra.mxu0 0.0
  %516 = vmatprep.subr.mxu0 0.0
  %517 = vmatpush1.msra.mxu0 0.0
  %518 = vmatprep.subr.mxu0 0.0
  %519 = vmatpush1.msra.mxu0 0.0
  %520 = vmatprep.subr.mxu0 0.0
  %521 = vmatpush1.msra.mxu0 0.0
  %522 = vmatprep.subr.mxu0 0.0
  %523 = vmatpush1.msra.mxu0 0.0
  %524 = vmatprep.subr.mxu0 0.0
  %525 = vmatpush1.msra.mxu0 0.0
  %526 = vmatprep.subr.mxu0 0.0
  %527 = vmatpush1.msra.mxu0 0.0
  %528 = vmatprep.subr.mxu0 0.0
  %529 = vmatpush1.msra.mxu0 0.0
  %530 = vmatprep.subr.mxu0 0.0
  %531 = vmatpush1.msra.mxu0 0.0
  %532 = vmatprep.mubr.f32.mxu0 0.0
  %v533 = vand.u32 %v57, 4294901760
  %534 = vmatmul.mubr.f32.gmra.mrb[0].mxu0 %v533
  %v535 = vpop.f32.mrb[0].mxu0
  %v536 = vadd.f32 %v438, %v535
  %v537 = vpop.f32.mrb[0].mxu0
  %538 = vmatprep.mubr.f32.mxu0 0.0
  %v539 = vand.u32 %v60, 4294901760
  %540 = vmatmul.mubr.f32.gmra.mrb[0].mxu0 %v539
  %v541 = vpop.f32.mrb[0].mxu0
  %v542 = vadd.f32 %v446, %v541
  %v543 = vpop.f32.mrb[0].mxu0
  %544 = vmatprep.mubr.f32.mxu0 0.0
  %v545 = vand.u32 %v63, 4294901760
  %546 = vmatmul.mubr.f32.gmra.mrb[0].mxu0 %v545
  %v547 = vpop.f32.mrb[0].mxu0
  %v548 = vadd.f32 %v454, %v547
  %v549 = vpop.f32.mrb[0].mxu0
  %550 = vmatprep.mubr.f32.mxu0 0.0
  %v551 = vand.u32 %v66, 4294901760
  %552 = vmatmul.mubr.f32.gmra.mrb[0].mxu0 %v551
  %v553 = vpop.f32.mrb[0].mxu0
  %v554 = vadd.f32 %v462, %v553
  %v555 = vpop.f32.mrb[0].mxu0
  %556 = vdwg.mxu0
  %557 = vmatprep.subr.mxu0 0.0
  %v558 = vand.u32 %v70, 4294901760
  %559 = vmatpush1.msra.mxu0 %v558
  %560 = vmatprep.subr.mxu0 0.0
  %561 = vmatpush1.msra.mxu0 0.0
  %562 = vmatprep.subr.mxu0 0.0
  %563 = vmatpush1.msra.mxu0 0.0
  %564 = vmatprep.subr.mxu0 0.0
  %565 = vmatpush1.msra.mxu0 0.0
  %566 = vmatprep.subr.mxu0 0.0
  %567 = vmatpush1.msra.mxu0 0.0
  %568 = vmatprep.subr.mxu0 0.0
  %569 = vmatpush1.msra.mxu0 0.0
  %570 = vmatprep.subr.mxu0 0.0
  %571 = vmatpush1.msra.mxu0 0.0
  %572 = vmatprep.subr.mxu0 0.0
  %573 = vmatpush1.msra.mxu0 0.0
  %574 = vmatprep.subr.mxu0 0.0
  %575 = vmatpush1.msra.mxu0 0.0
  %576 = vmatprep.subr.mxu0 0.0
  %577 = vmatpush1.msra.mxu0 0.0
  %578 = vmatprep.subr.mxu0 0.0
  %579 = vmatpush1.msra.mxu0 0.0
  %580 = vmatprep.subr.mxu0 0.0
  %581 = vmatpush1.msra.mxu0 0.0
  %582 = vmatprep.subr.mxu0 0.0
  %583 = vmatpush1.msra.mxu0 0.0
  %584 = vmatprep.subr.mxu0 0.0
  %585 = vmatpush1.msra.mxu0 0.0
  %586 = vmatprep.subr.mxu0 0.0
  %587 = vmatpush1.msra.mxu0 0.0
  %588 = vmatprep.subr.mxu0 0.0
  %589 = vmatpush1.msra.mxu0 0.0
  %590 = vmatprep.subr.mxu0 0.0
  %591 = vmatpush1.msra.mxu0 0.0
  %592 = vmatprep.subr.mxu0 0.0
  %593 = vmatpush1.msra.mxu0 0.0
  %594 = vmatprep.subr.mxu0 0.0
  %595 = vmatpush1.msra.mxu0 0.0
  %596 = vmatprep.subr.mxu0 0.0
  %597 = vmatpush1.msra.mxu0 0.0
  %598 = vmatprep.subr.mxu0 0.0
  %599 = vmatpush1.msra.mxu0 0.0
  %600 = vmatprep.subr.mxu0 0.0
  %601 = vmatpush1.msra.mxu0 0.0
  %602 = vmatprep.subr.mxu0 0.0
  %603 = vmatpush1.msra.mxu0 0.0
  %604 = vmatprep.subr.mxu0 0.0
  %605 = vmatpush1.msra.mxu0 0.0
  %606 = vmatprep.subr.mxu0 0.0
  %607 = vmatpush1.msra.mxu0 0.0
  %608 = vmatprep.subr.mxu0 0.0
  %609 = vmatpush1.msra.mxu0 0.0
  %610 = vmatprep.subr.mxu0 0.0
  %611 = vmatpush1.msra.mxu0 0.0
  %612 = vmatprep.subr.mxu0 0.0
  %613 = vmatpush1.msra.mxu0 0.0
  %614 = vmatprep.subr.mxu0 0.0
  %615 = vmatpush1.msra.mxu0 0.0
  %616 = vmatprep.subr.mxu0 0.0
  %617 = vmatpush1.msra.mxu0 0.0
  %618 = vmatprep.subr.mxu0 0.0
  %619 = vmatpush1.msra.mxu0 0.0
  %620 = vmatprep.subr.mxu0 0.0
  %621 = vmatpush1.msra.mxu0 0.0
  %622 = vmatprep.mubr.f32.mxu0 0.0
  %v623 = vand.u32 %v57, 4294901760
  %624 = vmatmul.mubr.f32.gmra.mrb[0].mxu0 %v623
  %v625 = vpop.f32.mrb[0].mxu0
  %v626 = vadd.f32 %v536, %v625
  %v627 = vpop.f32.mrb[0].mxu0
  %628 = vmatprep.mubr.f32.mxu0 0.0
  %v629 = vand.u32 %v60, 4294901760
  %630 = vmatmul.mubr.f32.gmra.mrb[0].mxu0 %v629
  %v631 = vpop.f32.mrb[0].mxu0
  %v632 = vadd.f32 %v542, %v631
  %v633 = vpop.f32.mrb[0].mxu0
  %634 = vmatprep.mubr.f32.mxu0 0.0
  %v635 = vand.u32 %v63, 4294901760
  %636 = vmatmul.mubr.f32.gmra.mrb[0].mxu0 %v635
  %v637 = vpop.f32.mrb[0].mxu0
  %v638 = vadd.f32 %v548, %v637
  %v639 = vpop.f32.mrb[0].mxu0
  %640 = vmatprep.mubr.f32.mxu0 0.0
  %v641 = vand.u32 %v66, 4294901760
  %642 = vmatmul.mubr.f32.gmra.mrb[0].mxu0 %v641
  %v643 = vpop.f32.mrb[0].mxu0
  %v644 = vadd.f32 %v554, %v643
  %v645 = vpop.f32.mrb[0].mxu0
  %646 = vdwg.mxu0
  %v647 = vmax.f32 %v626, 0.0
  %v648 = vmax.f32 %v632, 0.0
  %v649 = vmax.f32 %v638, 0.0
  %v650 = vmax.f32 %v644, 0.0
  %v651 = vld [vmem:[%s3] sm:$0xff]
  %v652 = vld [vmem:[%s3 + $0x8] sm:$0xff]
  %v653 = vld [vmem:[%s3 + $0x10] sm:$0xf]
  %v654 = vld [vmem:[%s4] sm:$0xff]
  %v655 = vld [vmem:[%s4 + $0x8] sm:$0xff]
  %v656 = vld [vmem:[%s4 + $0x10] sm:$0xf]
  %658 = vset.pattern.permute.xlu0 0
  %659 = vperm.xlu0 %658, %v654
  %v660 = vpop.permute.xlu0 %659
  %663 = vset.pattern.permute.xlu0 0
  %664 = vperm.xlu0 %663, %v655
  %v665 = vpop.permute.xlu0 %664
  %668 = vset.pattern.permute.xlu0 0
  %669 = vperm.xlu0 %668, %v656
  %v670 = vpop.permute.xlu0 %669
  %vm672 = vcmask 203776
  %v674 = vsel %vm672, %v651, 0
  %v677 = vsel %vm672, %v652, 0
  %v680 = vsel %vm672, %v653, 0
  %vm682 = vcmask 1040384
  %v684 = vsel %vm682, %v650, 0
  %686 = vmatprep.subr.mxu0 0.0
  %v687 = vand.u32 %v647, 4294901760
  %688 = vmatpush1.msra.mxu0 %v687
  %689 = vmatprep.subr.mxu0 0.0
  %v690 = vand.u32 %v648, 4294901760
  %691 = vmatpush1.msra.mxu0 %v690
  %692 = vmatprep.subr.mxu0 0.0
  %v693 = vand.u32 %v649, 4294901760
  %694 = vmatpush1.msra.mxu0 %v693
  %695 = vmatprep.subr.mxu0 0.0
  %v696 = vand.u32 %v684, 4294901760
  %697 = vmatpush1.msra.mxu0 %v696
  %698 = vmatprep.subr.mxu0 0.0
  %699 = vmatpush1.msra.mxu0 0.0
  %700 = vmatprep.subr.mxu0 0.0
  %701 = vmatpush1.msra.mxu0 0.0
  %702 = vmatprep.subr.mxu0 0.0
  %703 = vmatpush1.msra.mxu0 0.0
  %704 = vmatprep.subr.mxu0 0.0
  %705 = vmatpush1.msra.mxu0 0.0
  %706 = vmatprep.subr.mxu0 0.0
  %707 = vmatpush1.msra.mxu0 0.0
  %708 = vmatprep.subr.mxu0 0.0
  %709 = vmatpush1.msra.mxu0 0.0
  %710 = vmatprep.subr.mxu0 0.0
  %711 = vmatpush1.msra.mxu0 0.0
  %712 = vmatprep.subr.mxu0 0.0
  %713 = vmatpush1.msra.mxu0 0.0
  %714 = vmatprep.subr.mxu0 0.0
  %715 = vmatpush1.msra.mxu0 0.0
  %716 = vmatprep.subr.mxu0 0.0
  %717 = vmatpush1.msra.mxu0 0.0
  %718 = vmatprep.subr.mxu0 0.0
  %719 = vmatpush1.msra.mxu0 0.0
  %720 = vmatprep.subr.mxu0 0.0
  %721 = vmatpush1.msra.mxu0 0.0
  %722 = vmatprep.subr.mxu0 0.0
  %723 = vmatpush1.msra.mxu0 0.0
  %724 = vmatprep.subr.mxu0 0.0
  %725 = vmatpush1.msra.mxu0 0.0
  %726 = vmatprep.subr.mxu0 0.0
  %727 = vmatpush1.msra.mxu0 0.0
  %728 = vmatprep.subr.mxu0 0.0
  %729 = vmatpush1.msra.mxu0 0.0
  %730 = vmatprep.subr.mxu0 0.0
  %731 = vmatpush1.msra.mxu0 0.0
  %732 = vmatprep.subr.mxu0 0.0
  %733 = vmatpush1.msra.mxu0 0.0
  %734 = vmatprep.subr.mxu0 0.0
  %735 = vmatpush1.msra.mxu0 0.0
  %736 = vmatprep.subr.mxu0 0.0
  %737 = vmatpush1.msra.mxu0 0.0
  %738 = vmatprep.subr.mxu0 0.0
  %739 = vmatpush1.msra.mxu0 0.0
  %740 = vmatprep.subr.mxu0 0.0
  %741 = vmatpush1.msra.mxu0 0.0
  %742 = vmatprep.subr.mxu0 0.0
  %743 = vmatpush1.msra.mxu0 0.0
  %744 = vmatprep.subr.mxu0 0.0
  %745 = vmatpush1.msra.mxu0 0.0
  %746 = vmatprep.subr.mxu0 0.0
  %747 = vmatpush1.msra.mxu0 0.0
  %748 = vmatprep.subr.mxu0 0.0
  %749 = vmatpush1.msra.mxu0 0.0
  %750 = vmatprep.subr.mxu0 0.0
  %751 = vmatpush1.msra.mxu0 0.0
  %752 = vmatprep.subr.mxu0 0.0
  %753 = vmatpush1.msra.mxu0 0.0
  %754 = vmatprep.mubr.f32.mxu0 0.0
  %v755 = vand.u32 %v674, 4294901760
  %v756 = vsub.f32 %v674, %v755
  %v757 = vand.u32 %v756, 4294901760
  %v758 = vsub.f32 %v756, %v757
  %v759 = vand.u32 %v758, 4294901760
  %760 = vmatmul.mubr.f32.gmra.mrb[0].mxu0 %v759
  %v761 = vpop.f32.mrb[0].mxu0
  %v762 = vadd.f32 %v660, %v761
  %v763 = vpop.f32.mrb[0].mxu0
  %764 = vmatprep.mubr.f32.mxu0 0.0
  %v765 = vand.u32 %v677, 4294901760
  %v766 = vsub.f32 %v677, %v765
  %v767 = vand.u32 %v766, 4294901760
  %v768 = vsub.f32 %v766, %v767
  %v769 = vand.u32 %v768, 4294901760
  %770 = vmatmul.mubr.f32.gmra.mrb[0].mxu0 %v769
  %v771 = vpop.f32.mrb[0].mxu0
  %v772 = vadd.f32 %v665, %v771
  %v773 = vpop.f32.mrb[0].mxu0
  %774 = vmatprep.mubr.f32.mxu0 0.0
  %v775 = vand.u32 %v680, 4294901760
  %v776 = vsub.f32 %v680, %v775
  %v777 = vand.u32 %v776, 4294901760
  %v778 = vsub.f32 %v776, %v777
  %v779 = vand.u32 %v778, 4294901760
  %780 = vmatmul.mubr.f32.gmra.mrb[0].mxu0 %v779
  %v781 = vpop.f32.mrb[0].mxu0
  %v782 = vadd.f32 %v670, %v781
  %v783 = vpop.f32.mrb[0].mxu0
  %784 = vdwg.mxu0
  %785 = vmatprep.subr.mxu0 0.0
  %v786 = vand.u32 %v647, 4294901760
  %v787 = vsub.f32 %v647, %v786
  %v788 = vand.u32 %v787, 4294901760
  %v789 = vsub.f32 %v787, %v788
  %v790 = vand.u32 %v789, 4294901760
  %791 = vmatpush1.msra.mxu0 %v790
  %792 = vmatprep.subr.mxu0 0.0
  %v793 = vand.u32 %v648, 4294901760
  %v794 = vsub.f32 %v648, %v793
  %v795 = vand.u32 %v794, 4294901760
  %v796 = vsub.f32 %v794, %v795
  %v797 = vand.u32 %v796, 4294901760
  %798 = vmatpush1.msra.mxu0 %v797
  %799 = vmatprep.subr.mxu0 0.0
  %v800 = vand.u32 %v649, 4294901760
  %v801 = vsub.f32 %v649, %v800
  %v802 = vand.u32 %v801, 4294901760
  %v803 = vsub.f32 %v801, %v802
  %v804 = vand.u32 %v803, 4294901760
  %805 = vmatpush1.msra.mxu0 %v804
  %806 = vmatprep.subr.mxu0 0.0
  %v807 = vand.u32 %v684, 4294901760
  %v808 = vsub.f32 %v684, %v807
  %v809 = vand.u32 %v808, 4294901760
  %v810 = vsub.f32 %v808, %v809
  %v811 = vand.u32 %v810, 4294901760
  %812 = vmatpush1.msra.mxu0 %v811
  %813 = vmatprep.subr.mxu0 0.0
  %814 = vmatpush1.msra.mxu0 0.0
  %815 = vmatprep.subr.mxu0 0.0
  %816 = vmatpush1.msra.mxu0 0.0
  %817 = vmatprep.subr.mxu0 0.0
  %818 = vmatpush1.msra.mxu0 0.0
  %819 = vmatprep.subr.mxu0 0.0
  %820 = vmatpush1.msra.mxu0 0.0
  %821 = vmatprep.subr.mxu0 0.0
  %822 = vmatpush1.msra.mxu0 0.0
  %823 = vmatprep.subr.mxu0 0.0
  %824 = vmatpush1.msra.mxu0 0.0
  %825 = vmatprep.subr.mxu0 0.0
  %826 = vmatpush1.msra.mxu0 0.0
  %827 = vmatprep.subr.mxu0 0.0
  %828 = vmatpush1.msra.mxu0 0.0
  %829 = vmatprep.subr.mxu0 0.0
  %830 = vmatpush1.msra.mxu0 0.0
  %831 = vmatprep.subr.mxu0 0.0
  %832 = vmatpush1.msra.mxu0 0.0
  %833 = vmatprep.subr.mxu0 0.0
  %834 = vmatpush1.msra.mxu0 0.0
  %835 = vmatprep.subr.mxu0 0.0
  %836 = vmatpush1.msra.mxu0 0.0
  %837 = vmatprep.subr.mxu0 0.0
  %838 = vmatpush1.msra.mxu0 0.0
  %839 = vmatprep.subr.mxu0 0.0
  %840 = vmatpush1.msra.mxu0 0.0
  %841 = vmatprep.subr.mxu0 0.0
  %842 = vmatpush1.msra.mxu0 0.0
  %843 = vmatprep.subr.mxu0 0.0
  %844 = vmatpush1.msra.mxu0 0.0
  %845 = vmatprep.subr.mxu0 0.0
  %846 = vmatpush1.msra.mxu0 0.0
  %847 = vmatprep.subr.mxu0 0.0
  %848 = vmatpush1.msra.mxu0 0.0
  %849 = vmatprep.subr.mxu0 0.0
  %850 = vmatpush1.msra.mxu0 0.0
  %851 = vmatprep.subr.mxu0 0.0
  %852 = vmatpush1.msra.mxu0 0.0
  %853 = vmatprep.subr.mxu0 0.0
  %854 = vmatpush1.msra.mxu0 0.0
  %855 = vmatprep.subr.mxu0 0.0
  %856 = vmatpush1.msra.mxu0 0.0
  %857 = vmatprep.subr.mxu0 0.0
  %858 = vmatpush1.msra.mxu0 0.0
  %859 = vmatprep.subr.mxu0 0.0
  %860 = vmatpush1.msra.mxu0 0.0
  %861 = vmatprep.subr.mxu0 0.0
  %862 = vmatpush1.msra.mxu0 0.0
  %863 = vmatprep.subr.mxu0 0.0
  %864 = vmatpush1.msra.mxu0 0.0
  %865 = vmatprep.subr.mxu0 0.0
  %866 = vmatpush1.msra.mxu0 0.0
  %867 = vmatprep.subr.mxu0 0.0
  %868 = vmatpush1.msra.mxu0 0.0
  %869 = vmatprep.mubr.f32.mxu0 0.0
  %v870 = vand.u32 %v674, 4294901760
  %871 = vmatmul.mubr.f32.gmra.mrb[0].mxu0 %v870
  %v872 = vpop.f32.mrb[0].mxu0
  %v873 = vadd.f32 %v762, %v872
  %v874 = vpop.f32.mrb[0].mxu0
  %875 = vmatprep.mubr.f32.mxu0 0.0
  %v876 = vand.u32 %v677, 4294901760
  %877 = vmatmul.mubr.f32.gmra.mrb[0].mxu0 %v876
  %v878 = vpop.f32.mrb[0].mxu0
  %v879 = vadd.f32 %v772, %v878
  %v880 = vpop.f32.mrb[0].mxu0
  %881 = vmatprep.mubr.f32.mxu0 0.0
  %v882 = vand.u32 %v680, 4294901760
  %883 = vmatmul.mubr.f32.gmra.mrb[0].mxu0 %v882
  %v884 = vpop.f32.mrb[0].mxu0
  %v885 = vadd.f32 %v782, %v884
  %v886 = vpop.f32.mrb[0].mxu0
  %887 = vdwg.mxu0
  %888 = vmatprep.subr.mxu0 0.0
  %v889 = vand.u32 %v647, 4294901760
  %v890 = vsub.f32 %v647, %v889
  %891 = vmatpush1.msra.mxu0 %v890
  %892 = vmatprep.subr.mxu0 0.0
  %v893 = vand.u32 %v648, 4294901760
  %v894 = vsub.f32 %v648, %v893
  %895 = vmatpush1.msra.mxu0 %v894
  %896 = vmatprep.subr.mxu0 0.0
  %v897 = vand.u32 %v649, 4294901760
  %v898 = vsub.f32 %v649, %v897
  %899 = vmatpush1.msra.mxu0 %v898
  %900 = vmatprep.subr.mxu0 0.0
  %v901 = vand.u32 %v684, 4294901760
  %v902 = vsub.f32 %v684, %v901
  %903 = vmatpush1.msra.mxu0 %v902
  %904 = vmatprep.subr.mxu0 0.0
  %905 = vmatpush1.msra.mxu0 0.0
  %906 = vmatprep.subr.mxu0 0.0
  %907 = vmatpush1.msra.mxu0 0.0
  %908 = vmatprep.subr.mxu0 0.0
  %909 = vmatpush1.msra.mxu0 0.0
  %910 = vmatprep.subr.mxu0 0.0
  %911 = vmatpush1.msra.mxu0 0.0
  %912 = vmatprep.subr.mxu0 0.0
  %913 = vmatpush1.msra.mxu0 0.0
  %914 = vmatprep.subr.mxu0 0.0
  %915 = vmatpush1.msra.mxu0 0.0
  %916 = vmatprep.subr.mxu0 0.0
  %917 = vmatpush1.msra.mxu0 0.0
  %918 = vmatprep.subr.mxu0 0.0
  %919 = vmatpush1.msra.mxu0 0.0
  %920 = vmatprep.subr.mxu0 0.0
  %921 = vmatpush1.msra.mxu0 0.0
  %922 = vmatprep.subr.mxu0 0.0
  %923 = vmatpush1.msra.mxu0 0.0
  %924 = vmatprep.subr.mxu0 0.0
  %925 = vmatpush1.msra.mxu0 0.0
  %926 = vmatprep.subr.mxu0 0.0
  %927 = vmatpush1.msra.mxu0 0.0
  %928 = vmatprep.subr.mxu0 0.0
  %929 = vmatpush1.msra.mxu0 0.0
  %930 = vmatprep.subr.mxu0 0.0
  %931 = vmatpush1.msra.mxu0 0.0
  %932 = vmatprep.subr.mxu0 0.0
  %933 = vmatpush1.msra.mxu0 0.0
  %934 = vmatprep.subr.mxu0 0.0
  %935 = vmatpush1.msra.mxu0 0.0
  %936 = vmatprep.subr.mxu0 0.0
  %937 = vmatpush1.msra.mxu0 0.0
  %938 = vmatprep.subr.mxu0 0.0
  %939 = vmatpush1.msra.mxu0 0.0
  %940 = vmatprep.subr.mxu0 0.0
  %941 = vmatpush1.msra.mxu0 0.0
  %942 = vmatprep.subr.mxu0 0.0
  %943 = vmatpush1.msra.mxu0 0.0
  %944 = vmatprep.subr.mxu0 0.0
  %945 = vmatpush1.msra.mxu0 0.0
  %946 = vmatprep.subr.mxu0 0.0
  %947 = vmatpush1.msra.mxu0 0.0
  %948 = vmatprep.subr.mxu0 0.0
  %949 = vmatpush1.msra.mxu0 0.0
  %950 = vmatprep.subr.mxu0 0.0
  %951 = vmatpush1.msra.mxu0 0.0
  %952 = vmatprep.subr.mxu0 0.0
  %953 = vmatpush1.msra.mxu0 0.0
  %954 = vmatprep.subr.mxu0 0.0
  %955 = vmatpush1.msra.mxu0 0.0
  %956 = vmatprep.subr.mxu0 0.0
  %957 = vmatpush1.msra.mxu0 0.0
  %958 = vmatprep.subr.mxu0 0.0
  %959 = vmatpush1.msra.mxu0 0.0
  %960 = vmatprep.mubr.f32.mxu0 0.0
  %v961 = vand.u32 %v674, 4294901760
  %v962 = vsub.f32 %v674, %v961
  %963 = vmatmul.mubr.f32.gmra.mrb[0].mxu0 %v962
  %v964 = vpop.f32.mrb[0].mxu0
  %v965 = vadd.f32 %v873, %v964
  %v966 = vpop.f32.mrb[0].mxu0
  %967 = vmatprep.mubr.f32.mxu0 0.0
  %v968 = vand.u32 %v677, 4294901760
  %v969 = vsub.f32 %v677, %v968
  %970 = vmatmul.mubr.f32.gmra.mrb[0].mxu0 %v969
  %v971 = vpop.f32.mrb[0].mxu0
  %v972 = vadd.f32 %v879, %v971
  %v973 = vpop.f32.mrb[0].mxu0
  %974 = vmatprep.mubr.f32.mxu0 0.0
  %v975 = vand.u32 %v680, 4294901760
  %v976 = vsub.f32 %v680, %v975
  %977 = vmatmul.mubr.f32.gmra.mrb[0].mxu0 %v976
  %v978 = vpop.f32.mrb[0].mxu0
  %v979 = vadd.f32 %v885, %v978
  %v980 = vpop.f32.mrb[0].mxu0
  %981 = vdwg.mxu0
  %982 = vmatprep.subr.mxu0 0.0
  %v983 = vand.u32 %v647, 4294901760
  %984 = vmatpush1.msra.mxu0 %v983
  %985 = vmatprep.subr.mxu0 0.0
  %v986 = vand.u32 %v648, 4294901760
  %987 = vmatpush1.msra.mxu0 %v986
  %988 = vmatprep.subr.mxu0 0.0
  %v989 = vand.u32 %v649, 4294901760
  %990 = vmatpush1.msra.mxu0 %v989
  %991 = vmatprep.subr.mxu0 0.0
  %v992 = vand.u32 %v684, 4294901760
  %993 = vmatpush1.msra.mxu0 %v992
  %994 = vmatprep.subr.mxu0 0.0
  %995 = vmatpush1.msra.mxu0 0.0
  %996 = vmatprep.subr.mxu0 0.0
  %997 = vmatpush1.msra.mxu0 0.0
  %998 = vmatprep.subr.mxu0 0.0
  %999 = vmatpush1.msra.mxu0 0.0
  %1000 = vmatprep.subr.mxu0 0.0
  %1001 = vmatpush1.msra.mxu0 0.0
  %1002 = vmatprep.subr.mxu0 0.0
  %1003 = vmatpush1.msra.mxu0 0.0
  %1004 = vmatprep.subr.mxu0 0.0
  %1005 = vmatpush1.msra.mxu0 0.0
  %1006 = vmatprep.subr.mxu0 0.0
  %1007 = vmatpush1.msra.mxu0 0.0
  %1008 = vmatprep.subr.mxu0 0.0
  %1009 = vmatpush1.msra.mxu0 0.0
  %1010 = vmatprep.subr.mxu0 0.0
  %1011 = vmatpush1.msra.mxu0 0.0
  %1012 = vmatprep.subr.mxu0 0.0
  %1013 = vmatpush1.msra.mxu0 0.0
  %1014 = vmatprep.subr.mxu0 0.0
  %1015 = vmatpush1.msra.mxu0 0.0
  %1016 = vmatprep.subr.mxu0 0.0
  %1017 = vmatpush1.msra.mxu0 0.0
  %1018 = vmatprep.subr.mxu0 0.0
  %1019 = vmatpush1.msra.mxu0 0.0
  %1020 = vmatprep.subr.mxu0 0.0
  %1021 = vmatpush1.msra.mxu0 0.0
  %1022 = vmatprep.subr.mxu0 0.0
  %1023 = vmatpush1.msra.mxu0 0.0
  %1024 = vmatprep.subr.mxu0 0.0
  %1025 = vmatpush1.msra.mxu0 0.0
  %1026 = vmatprep.subr.mxu0 0.0
  %1027 = vmatpush1.msra.mxu0 0.0
  %1028 = vmatprep.subr.mxu0 0.0
  %1029 = vmatpush1.msra.mxu0 0.0
  %1030 = vmatprep.subr.mxu0 0.0
  %1031 = vmatpush1.msra.mxu0 0.0
  %1032 = vmatprep.subr.mxu0 0.0
  %1033 = vmatpush1.msra.mxu0 0.0
  %1034 = vmatprep.subr.mxu0 0.0
  %1035 = vmatpush1.msra.mxu0 0.0
  %1036 = vmatprep.subr.mxu0 0.0
  %1037 = vmatpush1.msra.mxu0 0.0
  %1038 = vmatprep.subr.mxu0 0.0
  %1039 = vmatpush1.msra.mxu0 0.0
  %1040 = vmatprep.subr.mxu0 0.0
  %1041 = vmatpush1.msra.mxu0 0.0
  %1042 = vmatprep.subr.mxu0 0.0
  %1043 = vmatpush1.msra.mxu0 0.0
  %1044 = vmatprep.subr.mxu0 0.0
  %1045 = vmatpush1.msra.mxu0 0.0
  %1046 = vmatprep.subr.mxu0 0.0
  %1047 = vmatpush1.msra.mxu0 0.0
  %1048 = vmatprep.subr.mxu0 0.0
  %1049 = vmatpush1.msra.mxu0 0.0
  %1050 = vmatprep.mubr.f32.mxu0 0.0
  %v1051 = vand.u32 %v674, 4294901760
  %v1052 = vsub.f32 %v674, %v1051
  %v1053 = vand.u32 %v1052, 4294901760
  %1054 = vmatmul.mubr.f32.gmra.mrb[0].mxu0 %v1053
  %v1055 = vpop.f32.mrb[0].mxu0
  %v1056 = vadd.f32 %v965, %v1055
  %v1057 = vpop.f32.mrb[0].mxu0
  %1058 = vmatprep.mubr.f32.mxu0 0.0
  %v1059 = vand.u32 %v677, 4294901760
  %v1060 = vsub.f32 %v677, %v1059
  %v1061 = vand.u32 %v1060, 4294901760
  %1062 = vmatmul.mubr.f32.gmra.mrb[0].mxu0 %v1061
  %v1063 = vpop.f32.mrb[0].mxu0
  %v1064 = vadd.f32 %v972, %v1063
  %v1065 = vpop.f32.mrb[0].mxu0
  %1066 = vmatprep.mubr.f32.mxu0 0.0
  %v1067 = vand.u32 %v680, 4294901760
  %v1068 = vsub.f32 %v680, %v1067
  %v1069 = vand.u32 %v1068, 4294901760
  %1070 = vmatmul.mubr.f32.gmra.mrb[0].mxu0 %v1069
  %v1071 = vpop.f32.mrb[0].mxu0
  %v1072 = vadd.f32 %v979, %v1071
  %v1073 = vpop.f32.mrb[0].mxu0
  %1074 = vdwg.mxu0
  %1075 = vmatprep.subr.mxu0 0.0
  %v1076 = vand.u32 %v647, 4294901760
  %v1077 = vsub.f32 %v647, %v1076
  %v1078 = vand.u32 %v1077, 4294901760
  %1079 = vmatpush1.msra.mxu0 %v1078
  %1080 = vmatprep.subr.mxu0 0.0
  %v1081 = vand.u32 %v648, 4294901760
  %v1082 = vsub.f32 %v648, %v1081
  %v1083 = vand.u32 %v1082, 4294901760
  %1084 = vmatpush1.msra.mxu0 %v1083
  %1085 = vmatprep.subr.mxu0 0.0
  %v1086 = vand.u32 %v649, 4294901760
  %v1087 = vsub.f32 %v649, %v1086
  %v1088 = vand.u32 %v1087, 4294901760
  %1089 = vmatpush1.msra.mxu0 %v1088
  %1090 = vmatprep.subr.mxu0 0.0
  %v1091 = vand.u32 %v684, 4294901760
  %v1092 = vsub.f32 %v684, %v1091
  %v1093 = vand.u32 %v1092, 4294901760
  %1094 = vmatpush1.msra.mxu0 %v1093
  %1095 = vmatprep.subr.mxu0 0.0
  %1096 = vmatpush1.msra.mxu0 0.0
  %1097 = vmatprep.subr.mxu0 0.0
  %1098 = vmatpush1.msra.mxu0 0.0
  %1099 = vmatprep.subr.mxu0 0.0
  %1100 = vmatpush1.msra.mxu0 0.0
  %1101 = vmatprep.subr.mxu0 0.0
  %1102 = vmatpush1.msra.mxu0 0.0
  %1103 = vmatprep.subr.mxu0 0.0
  %1104 = vmatpush1.msra.mxu0 0.0
  %1105 = vmatprep.subr.mxu0 0.0
  %1106 = vmatpush1.msra.mxu0 0.0
  %1107 = vmatprep.subr.mxu0 0.0
  %1108 = vmatpush1.msra.mxu0 0.0
  %1109 = vmatprep.subr.mxu0 0.0
  %1110 = vmatpush1.msra.mxu0 0.0
  %1111 = vmatprep.subr.mxu0 0.0
  %1112 = vmatpush1.msra.mxu0 0.0
  %1113 = vmatprep.subr.mxu0 0.0
  %1114 = vmatpush1.msra.mxu0 0.0
  %1115 = vmatprep.subr.mxu0 0.0
  %1116 = vmatpush1.msra.mxu0 0.0
  %1117 = vmatprep.subr.mxu0 0.0
  %1118 = vmatpush1.msra.mxu0 0.0
  %1119 = vmatprep.subr.mxu0 0.0
  %1120 = vmatpush1.msra.mxu0 0.0
  %1121 = vmatprep.subr.mxu0 0.0
  %1122 = vmatpush1.msra.mxu0 0.0
  %1123 = vmatprep.subr.mxu0 0.0
  %1124 = vmatpush1.msra.mxu0 0.0
  %1125 = vmatprep.subr.mxu0 0.0
  %1126 = vmatpush1.msra.mxu0 0.0
  %1127 = vmatprep.subr.mxu0 0.0
  %1128 = vmatpush1.msra.mxu0 0.0
  %1129 = vmatprep.subr.mxu0 0.0
  %1130 = vmatpush1.msra.mxu0 0.0
  %1131 = vmatprep.subr.mxu0 0.0
  %1132 = vmatpush1.msra.mxu0 0.0
  %1133 = vmatprep.subr.mxu0 0.0
  %1134 = vmatpush1.msra.mxu0 0.0
  %1135 = vmatprep.subr.mxu0 0.0
  %1136 = vmatpush1.msra.mxu0 0.0
  %1137 = vmatprep.subr.mxu0 0.0
  %1138 = vmatpush1.msra.mxu0 0.0
  %1139 = vmatprep.subr.mxu0 0.0
  %1140 = vmatpush1.msra.mxu0 0.0
  %1141 = vmatprep.subr.mxu0 0.0
  %1142 = vmatpush1.msra.mxu0 0.0
  %1143 = vmatprep.subr.mxu0 0.0
  %1144 = vmatpush1.msra.mxu0 0.0
  %1145 = vmatprep.subr.mxu0 0.0
  %1146 = vmatpush1.msra.mxu0 0.0
  %1147 = vmatprep.subr.mxu0 0.0
  %1148 = vmatpush1.msra.mxu0 0.0
  %1149 = vmatprep.subr.mxu0 0.0
  %1150 = vmatpush1.msra.mxu0 0.0
  %1151 = vmatprep.mubr.f32.mxu0 0.0
  %v1152 = vand.u32 %v674, 4294901760
  %1153 = vmatmul.mubr.f32.gmra.mrb[0].mxu0 %v1152
  %v1154 = vpop.f32.mrb[0].mxu0
  %v1155 = vadd.f32 %v1056, %v1154
  %v1156 = vpop.f32.mrb[0].mxu0
  %1157 = vmatprep.mubr.f32.mxu0 0.0
  %v1158 = vand.u32 %v677, 4294901760
  %1159 = vmatmul.mubr.f32.gmra.mrb[0].mxu0 %v1158
  %v1160 = vpop.f32.mrb[0].mxu0
  %v1161 = vadd.f32 %v1064, %v1160
  %v1162 = vpop.f32.mrb[0].mxu0
  %1163 = vmatprep.mubr.f32.mxu0 0.0
  %v1164 = vand.u32 %v680, 4294901760
  %1165 = vmatmul.mubr.f32.gmra.mrb[0].mxu0 %v1164
  %v1166 = vpop.f32.mrb[0].mxu0
  %v1167 = vadd.f32 %v1072, %v1166
  %v1168 = vpop.f32.mrb[0].mxu0
  %1169 = vdwg.mxu0
  %1170 = vmatprep.subr.mxu0 0.0
  %v1171 = vand.u32 %v647, 4294901760
  %1172 = vmatpush1.msra.mxu0 %v1171
  %1173 = vmatprep.subr.mxu0 0.0
  %v1174 = vand.u32 %v648, 4294901760
  %1175 = vmatpush1.msra.mxu0 %v1174
  %1176 = vmatprep.subr.mxu0 0.0
  %v1177 = vand.u32 %v649, 4294901760
  %1178 = vmatpush1.msra.mxu0 %v1177
  %1179 = vmatprep.subr.mxu0 0.0
  %v1180 = vand.u32 %v684, 4294901760
  %1181 = vmatpush1.msra.mxu0 %v1180
  %1182 = vmatprep.subr.mxu0 0.0
  %1183 = vmatpush1.msra.mxu0 0.0
  %1184 = vmatprep.subr.mxu0 0.0
  %1185 = vmatpush1.msra.mxu0 0.0
  %1186 = vmatprep.subr.mxu0 0.0
  %1187 = vmatpush1.msra.mxu0 0.0
  %1188 = vmatprep.subr.mxu0 0.0
  %1189 = vmatpush1.msra.mxu0 0.0
  %1190 = vmatprep.subr.mxu0 0.0
  %1191 = vmatpush1.msra.mxu0 0.0
  %1192 = vmatprep.subr.mxu0 0.0
  %1193 = vmatpush1.msra.mxu0 0.0
  %1194 = vmatprep.subr.mxu0 0.0
  %1195 = vmatpush1.msra.mxu0 0.0
  %1196 = vmatprep.subr.mxu0 0.0
  %1197 = vmatpush1.msra.mxu0 0.0
  %1198 = vmatprep.subr.mxu0 0.0
  %1199 = vmatpush1.msra.mxu0 0.0
  %1200 = vmatprep.subr.mxu0 0.0
  %1201 = vmatpush1.msra.mxu0 0.0
  %1202 = vmatprep.subr.mxu0 0.0
  %1203 = vmatpush1.msra.mxu0 0.0
  %1204 = vmatprep.subr.mxu0 0.0
  %1205 = vmatpush1.msra.mxu0 0.0
  %1206 = vmatprep.subr.mxu0 0.0
  %1207 = vmatpush1.msra.mxu0 0.0
  %1208 = vmatprep.subr.mxu0 0.0
  %1209 = vmatpush1.msra.mxu0 0.0
  %1210 = vmatprep.subr.mxu0 0.0
  %1211 = vmatpush1.msra.mxu0 0.0
  %1212 = vmatprep.subr.mxu0 0.0
  %1213 = vmatpush1.msra.mxu0 0.0
  %1214 = vmatprep.subr.mxu0 0.0
  %1215 = vmatpush1.msra.mxu0 0.0
  %1216 = vmatprep.subr.mxu0 0.0
  %1217 = vmatpush1.msra.mxu0 0.0
  %1218 = vmatprep.subr.mxu0 0.0
  %1219 = vmatpush1.msra.mxu0 0.0
  %1220 = vmatprep.subr.mxu0 0.0
  %1221 = vmatpush1.msra.mxu0 0.0
  %1222 = vmatprep.subr.mxu0 0.0
  %1223 = vmatpush1.msra.mxu0 0.0
  %1224 = vmatprep.subr.mxu0 0.0
  %1225 = vmatpush1.msra.mxu0 0.0
  %1226 = vmatprep.subr.mxu0 0.0
  %1227 = vmatpush1.msra.mxu0 0.0
  %1228 = vmatprep.subr.mxu0 0.0
  %1229 = vmatpush1.msra.mxu0 0.0
  %1230 = vmatprep.subr.mxu0 0.0
  %1231 = vmatpush1.msra.mxu0 0.0
  %1232 = vmatprep.subr.mxu0 0.0
  %1233 = vmatpush1.msra.mxu0 0.0
  %1234 = vmatprep.subr.mxu0 0.0
  %1235 = vmatpush1.msra.mxu0 0.0
  %1236 = vmatprep.subr.mxu0 0.0
  %1237 = vmatpush1.msra.mxu0 0.0
  %1238 = vmatprep.mubr.f32.mxu0 0.0
  %v1239 = vand.u32 %v674, 4294901760
  %1240 = vmatmul.mubr.f32.gmra.mrb[0].mxu0 %v1239
  %v1241 = vpop.f32.mrb[0].mxu0
  %v1242 = vadd.f32 %v1155, %v1241
  %v1243 = vpop.f32.mrb[0].mxu0
  %1244 = vmatprep.mubr.f32.mxu0 0.0
  %v1245 = vand.u32 %v677, 4294901760
  %1246 = vmatmul.mubr.f32.gmra.mrb[0].mxu0 %v1245
  %v1247 = vpop.f32.mrb[0].mxu0
  %v1248 = vadd.f32 %v1161, %v1247
  %v1249 = vpop.f32.mrb[0].mxu0
  %1250 = vmatprep.mubr.f32.mxu0 0.0
  %v1251 = vand.u32 %v680, 4294901760
  %1252 = vmatmul.mubr.f32.gmra.mrb[0].mxu0 %v1251
  %v1253 = vpop.f32.mrb[0].mxu0
  %v1254 = vadd.f32 %v1167, %v1253
  %v1255 = vpop.f32.mrb[0].mxu0
  %1256 = vdwg.mxu0
  %v1257 = vmax.f32 %v1242, 0.0
  %v1258 = vmax.f32 %v1248, 0.0
  %v1259 = vmax.f32 %v1254, 0.0
  %v1260 = vld [vmem:[%s5] sm:$0x3]
  %v1261 = vld [vmem:[%s6] sm:$0x3]
  %1263 = vset.pattern.permute.xlu0 0
  %1264 = vperm.xlu0 %1263, %v1261
  %v1265 = vpop.permute.xlu0 %1264
  %vm1267 = vcmask 162816
  %v1269 = vsel %vm1267, %v1260, 0
  %v1272 = vsel %vm68, %v1259, 0
  %1274 = vmatprep.subr.mxu0 0.0
  %v1275 = vand.u32 %v1257, 4294901760
  %1276 = vmatpush1.msra.mxu0 %v1275
  %1277 = vmatprep.subr.mxu0 0.0
  %v1278 = vand.u32 %v1258, 4294901760
  %1279 = vmatpush1.msra.mxu0 %v1278
  %1280 = vmatprep.subr.mxu0 0.0
  %v1281 = vand.u32 %v1272, 4294901760
  %1282 = vmatpush1.msra.mxu0 %v1281
  %1283 = vmatprep.subr.mxu0 0.0
  %1284 = vmatpush1.msra.mxu0 0.0
  %1285 = vmatprep.subr.mxu0 0.0
  %1286 = vmatpush1.msra.mxu0 0.0
  %1287 = vmatprep.subr.mxu0 0.0
  %1288 = vmatpush1.msra.mxu0 0.0
  %1289 = vmatprep.subr.mxu0 0.0
  %1290 = vmatpush1.msra.mxu0 0.0
  %1291 = vmatprep.subr.mxu0 0.0
  %1292 = vmatpush1.msra.mxu0 0.0
  %1293 = vmatprep.subr.mxu0 0.0
  %1294 = vmatpush1.msra.mxu0 0.0
  %1295 = vmatprep.subr.mxu0 0.0
  %1296 = vmatpush1.msra.mxu0 0.0
  %1297 = vmatprep.subr.mxu0 0.0
  %1298 = vmatpush1.msra.mxu0 0.0
  %1299 = vmatprep.subr.mxu0 0.0
  %1300 = vmatpush1.msra.mxu0 0.0
  %1301 = vmatprep.subr.mxu0 0.0
  %1302 = vmatpush1.msra.mxu0 0.0
  %1303 = vmatprep.subr.mxu0 0.0
  %1304 = vmatpush1.msra.mxu0 0.0
  %1305 = vmatprep.subr.mxu0 0.0
  %1306 = vmatpush1.msra.mxu0 0.0
  %1307 = vmatprep.subr.mxu0 0.0
  %1308 = vmatpush1.msra.mxu0 0.0
  %1309 = vmatprep.subr.mxu0 0.0
  %1310 = vmatpush1.msra.mxu0 0.0
  %1311 = vmatprep.subr.mxu0 0.0
  %1312 = vmatpush1.msra.mxu0 0.0
  %1313 = vmatprep.subr.mxu0 0.0
  %1314 = vmatpush1.msra.mxu0 0.0
  %1315 = vmatprep.subr.mxu0 0.0
  %1316 = vmatpush1.msra.mxu0 0.0
  %1317 = vmatprep.subr.mxu0 0.0
  %1318 = vmatpush1.msra.mxu0 0.0
  %1319 = vmatprep.subr.mxu0 0.0
  %1320 = vmatpush1.msra.mxu0 0.0
  %1321 = vmatprep.subr.mxu0 0.0
  %1322 = vmatpush1.msra.mxu0 0.0
  %1323 = vmatprep.subr.mxu0 0.0
  %1324 = vmatpush1.msra.mxu0 0.0
  %1325 = vmatprep.subr.mxu0 0.0
  %1326 = vmatpush1.msra.mxu0 0.0
  %1327 = vmatprep.subr.mxu0 0.0
  %1328 = vmatpush1.msra.mxu0 0.0
  %1329 = vmatprep.subr.mxu0 0.0
  %1330 = vmatpush1.msra.mxu0 0.0
  %1331 = vmatprep.subr.mxu0 0.0
  %1332 = vmatpush1.msra.mxu0 0.0
  %1333 = vmatprep.subr.mxu0 0.0
  %1334 = vmatpush1.msra.mxu0 0.0
  %1335 = vmatprep.subr.mxu0 0.0
  %1336 = vmatpush1.msra.mxu0 0.0
  %1337 = vmatprep.subr.mxu0 0.0
  %1338 = vmatpush1.msra.mxu0 0.0
  %1339 = vmatprep.subr.mxu0 0.0
  %1340 = vmatpush1.msra.mxu0 0.0
  %1341 = vmatprep.mubr.f32.mxu0 0.0
  %v1342 = vand.u32 %v1269, 4294901760
  %v1343 = vsub.f32 %v1269, %v1342
  %v1344 = vand.u32 %v1343, 4294901760
  %v1345 = vsub.f32 %v1343, %v1344
  %v1346 = vand.u32 %v1345, 4294901760
  %1347 = vmatmul.mubr.f32.gmra.mrb[0].mxu0 %v1346
  %v1348 = vpop.f32.mrb[0].mxu0
  %v1349 = vadd.f32 %v1265, %v1348
  %v1350 = vpop.f32.mrb[0].mxu0
  %1351 = vdwg.mxu0
  %1352 = vmatprep.subr.mxu0 0.0
  %v1353 = vand.u32 %v1257, 4294901760
  %v1354 = vsub.f32 %v1257, %v1353
  %v1355 = vand.u32 %v1354, 4294901760
  %v1356 = vsub.f32 %v1354, %v1355
  %v1357 = vand.u32 %v1356, 4294901760
  %1358 = vmatpush1.msra.mxu0 %v1357
  %1359 = vmatprep.subr.mxu0 0.0
  %v1360 = vand.u32 %v1258, 4294901760
  %v1361 = vsub.f32 %v1258, %v1360
  %v1362 = vand.u32 %v1361, 4294901760
  %v1363 = vsub.f32 %v1361, %v1362
  %v1364 = vand.u32 %v1363, 4294901760
  %1365 = vmatpush1.msra.mxu0 %v1364
  %1366 = vmatprep.subr.mxu0 0.0
  %v1367 = vand.u32 %v1272, 4294901760
  %v1368 = vsub.f32 %v1272, %v1367
  %v1369 = vand.u32 %v1368, 4294901760
  %v1370 = vsub.f32 %v1368, %v1369
  %v1371 = vand.u32 %v1370, 4294901760
  %1372 = vmatpush1.msra.mxu0 %v1371
  %1373 = vmatprep.subr.mxu0 0.0
  %1374 = vmatpush1.msra.mxu0 0.0
  %1375 = vmatprep.subr.mxu0 0.0
  %1376 = vmatpush1.msra.mxu0 0.0
  %1377 = vmatprep.subr.mxu0 0.0
  %1378 = vmatpush1.msra.mxu0 0.0
  %1379 = vmatprep.subr.mxu0 0.0
  %1380 = vmatpush1.msra.mxu0 0.0
  %1381 = vmatprep.subr.mxu0 0.0
  %1382 = vmatpush1.msra.mxu0 0.0
  %1383 = vmatprep.subr.mxu0 0.0
  %1384 = vmatpush1.msra.mxu0 0.0
  %1385 = vmatprep.subr.mxu0 0.0
  %1386 = vmatpush1.msra.mxu0 0.0
  %1387 = vmatprep.subr.mxu0 0.0
  %1388 = vmatpush1.msra.mxu0 0.0
  %1389 = vmatprep.subr.mxu0 0.0
  %1390 = vmatpush1.msra.mxu0 0.0
  %1391 = vmatprep.subr.mxu0 0.0
  %1392 = vmatpush1.msra.mxu0 0.0
  %1393 = vmatprep.subr.mxu0 0.0
  %1394 = vmatpush1.msra.mxu0 0.0
  %1395 = vmatprep.subr.mxu0 0.0
  %1396 = vmatpush1.msra.mxu0 0.0
  %1397 = vmatprep.subr.mxu0 0.0
  %1398 = vmatpush1.msra.mxu0 0.0
  %1399 = vmatprep.subr.mxu0 0.0
  %1400 = vmatpush1.msra.mxu0 0.0
  %1401 = vmatprep.subr.mxu0 0.0
  %1402 = vmatpush1.msra.mxu0 0.0
  %1403 = vmatprep.subr.mxu0 0.0
  %1404 = vmatpush1.msra.mxu0 0.0
  %1405 = vmatprep.subr.mxu0 0.0
  %1406 = vmatpush1.msra.mxu0 0.0
  %1407 = vmatprep.subr.mxu0 0.0
  %1408 = vmatpush1.msra.mxu0 0.0
  %1409 = vmatprep.subr.mxu0 0.0
  %1410 = vmatpush1.msra.mxu0 0.0
  %1411 = vmatprep.subr.mxu0 0.0
  %1412 = vmatpush1.msra.mxu0 0.0
  %1413 = vmatprep.subr.mxu0 0.0
  %1414 = vmatpush1.msra.mxu0 0.0
  %1415 = vmatprep.subr.mxu0 0.0
  %1416 = vmatpush1.msra.mxu0 0.0
  %1417 = vmatprep.subr.mxu0 0.0
  %1418 = vmatpush1.msra.mxu0 0.0
  %1419 = vmatprep.subr.mxu0 0.0
  %1420 = vmatpush1.msra.mxu0 0.0
  %1421 = vmatprep.subr.mxu0 0.0
  %1422 = vmatpush1.msra.mxu0 0.0
  %1423 = vmatprep.subr.mxu0 0.0
  %1424 = vmatpush1.msra.mxu0 0.0
  %1425 = vmatprep.subr.mxu0 0.0
  %1426 = vmatpush1.msra.mxu0 0.0
  %1427 = vmatprep.subr.mxu0 0.0
  %1428 = vmatpush1.msra.mxu0 0.0
  %1429 = vmatprep.subr.mxu0 0.0
  %1430 = vmatpush1.msra.mxu0 0.0
  %1431 = vmatprep.mubr.f32.mxu0 0.0
  %v1432 = vand.u32 %v1269, 4294901760
  %1433 = vmatmul.mubr.f32.gmra.mrb[0].mxu0 %v1432
  %v1434 = vpop.f32.mrb[0].mxu0
  %v1435 = vadd.f32 %v1349, %v1434
  %v1436 = vpop.f32.mrb[0].mxu0
  %1437 = vdwg.mxu0
  %1438 = vmatprep.subr.mxu0 0.0
  %v1439 = vand.u32 %v1257, 4294901760
  %v1440 = vsub.f32 %v1257, %v1439
  %1441 = vmatpush1.msra.mxu0 %v1440
  %1442 = vmatprep.subr.mxu0 0.0
  %v1443 = vand.u32 %v1258, 4294901760
  %v1444 = vsub.f32 %v1258, %v1443
  %1445 = vmatpush1.msra.mxu0 %v1444
  %1446 = vmatprep.subr.mxu0 0.0
  %v1447 = vand.u32 %v1272, 4294901760
  %v1448 = vsub.f32 %v1272, %v1447
  %1449 = vmatpush1.msra.mxu0 %v1448
  %1450 = vmatprep.subr.mxu0 0.0
  %1451 = vmatpush1.msra.mxu0 0.0
  %1452 = vmatprep.subr.mxu0 0.0
  %1453 = vmatpush1.msra.mxu0 0.0
  %1454 = vmatprep.subr.mxu0 0.0
  %1455 = vmatpush1.msra.mxu0 0.0
  %1456 = vmatprep.subr.mxu0 0.0
  %1457 = vmatpush1.msra.mxu0 0.0
  %1458 = vmatprep.subr.mxu0 0.0
  %1459 = vmatpush1.msra.mxu0 0.0
  %1460 = vmatprep.subr.mxu0 0.0
  %1461 = vmatpush1.msra.mxu0 0.0
  %1462 = vmatprep.subr.mxu0 0.0
  %1463 = vmatpush1.msra.mxu0 0.0
  %1464 = vmatprep.subr.mxu0 0.0
  %1465 = vmatpush1.msra.mxu0 0.0
  %1466 = vmatprep.subr.mxu0 0.0
  %1467 = vmatpush1.msra.mxu0 0.0
  %1468 = vmatprep.subr.mxu0 0.0
  %1469 = vmatpush1.msra.mxu0 0.0
  %1470 = vmatprep.subr.mxu0 0.0
  %1471 = vmatpush1.msra.mxu0 0.0
  %1472 = vmatprep.subr.mxu0 0.0
  %1473 = vmatpush1.msra.mxu0 0.0
  %1474 = vmatprep.subr.mxu0 0.0
  %1475 = vmatpush1.msra.mxu0 0.0
  %1476 = vmatprep.subr.mxu0 0.0
  %1477 = vmatpush1.msra.mxu0 0.0
  %1478 = vmatprep.subr.mxu0 0.0
  %1479 = vmatpush1.msra.mxu0 0.0
  %1480 = vmatprep.subr.mxu0 0.0
  %1481 = vmatpush1.msra.mxu0 0.0
  %1482 = vmatprep.subr.mxu0 0.0
  %1483 = vmatpush1.msra.mxu0 0.0
  %1484 = vmatprep.subr.mxu0 0.0
  %1485 = vmatpush1.msra.mxu0 0.0
  %1486 = vmatprep.subr.mxu0 0.0
  %1487 = vmatpush1.msra.mxu0 0.0
  %1488 = vmatprep.subr.mxu0 0.0
  %1489 = vmatpush1.msra.mxu0 0.0
  %1490 = vmatprep.subr.mxu0 0.0
  %1491 = vmatpush1.msra.mxu0 0.0
  %1492 = vmatprep.subr.mxu0 0.0
  %1493 = vmatpush1.msra.mxu0 0.0
  %1494 = vmatprep.subr.mxu0 0.0
  %1495 = vmatpush1.msra.mxu0 0.0
  %1496 = vmatprep.subr.mxu0 0.0
  %1497 = vmatpush1.msra.mxu0 0.0
  %1498 = vmatprep.subr.mxu0 0.0
  %1499 = vmatpush1.msra.mxu0 0.0
  %1500 = vmatprep.subr.mxu0 0.0
  %1501 = vmatpush1.msra.mxu0 0.0
  %1502 = vmatprep.subr.mxu0 0.0
  %1503 = vmatpush1.msra.mxu0 0.0
  %1504 = vmatprep.subr.mxu0 0.0
  %1505 = vmatpush1.msra.mxu0 0.0
  %1506 = vmatprep.subr.mxu0 0.0
  %1507 = vmatpush1.msra.mxu0 0.0
  %1508 = vmatprep.mubr.f32.mxu0 0.0
  %v1509 = vand.u32 %v1269, 4294901760
  %v1510 = vsub.f32 %v1269, %v1509
  %1511 = vmatmul.mubr.f32.gmra.mrb[0].mxu0 %v1510
  %v1512 = vpop.f32.mrb[0].mxu0
  %v1513 = vadd.f32 %v1435, %v1512
  %v1514 = vpop.f32.mrb[0].mxu0
  %1515 = vdwg.mxu0
  %1516 = vmatprep.subr.mxu0 0.0
  %v1517 = vand.u32 %v1257, 4294901760
  %1518 = vmatpush1.msra.mxu0 %v1517
  %1519 = vmatprep.subr.mxu0 0.0
  %v1520 = vand.u32 %v1258, 4294901760
  %1521 = vmatpush1.msra.mxu0 %v1520
  %1522 = vmatprep.subr.mxu0 0.0
  %v1523 = vand.u32 %v1272, 4294901760
  %1524 = vmatpush1.msra.mxu0 %v1523
  %1525 = vmatprep.subr.mxu0 0.0
  %1526 = vmatpush1.msra.mxu0 0.0
  %1527 = vmatprep.subr.mxu0 0.0
  %1528 = vmatpush1.msra.mxu0 0.0
  %1529 = vmatprep.subr.mxu0 0.0
  %1530 = vmatpush1.msra.mxu0 0.0
  %1531 = vmatprep.subr.mxu0 0.0
  %1532 = vmatpush1.msra.mxu0 0.0
  %1533 = vmatprep.subr.mxu0 0.0
  %1534 = vmatpush1.msra.mxu0 0.0
  %1535 = vmatprep.subr.mxu0 0.0
  %1536 = vmatpush1.msra.mxu0 0.0
  %1537 = vmatprep.subr.mxu0 0.0
  %1538 = vmatpush1.msra.mxu0 0.0
  %1539 = vmatprep.subr.mxu0 0.0
  %1540 = vmatpush1.msra.mxu0 0.0
  %1541 = vmatprep.subr.mxu0 0.0
  %1542 = vmatpush1.msra.mxu0 0.0
  %1543 = vmatprep.subr.mxu0 0.0
  %1544 = vmatpush1.msra.mxu0 0.0
  %1545 = vmatprep.subr.mxu0 0.0
  %1546 = vmatpush1.msra.mxu0 0.0
  %1547 = vmatprep.subr.mxu0 0.0
  %1548 = vmatpush1.msra.mxu0 0.0
  %1549 = vmatprep.subr.mxu0 0.0
  %1550 = vmatpush1.msra.mxu0 0.0
  %1551 = vmatprep.subr.mxu0 0.0
  %1552 = vmatpush1.msra.mxu0 0.0
  %1553 = vmatprep.subr.mxu0 0.0
  %1554 = vmatpush1.msra.mxu0 0.0
  %1555 = vmatprep.subr.mxu0 0.0
  %1556 = vmatpush1.msra.mxu0 0.0
  %1557 = vmatprep.subr.mxu0 0.0
  %1558 = vmatpush1.msra.mxu0 0.0
  %1559 = vmatprep.subr.mxu0 0.0
  %1560 = vmatpush1.msra.mxu0 0.0
  %1561 = vmatprep.subr.mxu0 0.0
  %1562 = vmatpush1.msra.mxu0 0.0
  %1563 = vmatprep.subr.mxu0 0.0
  %1564 = vmatpush1.msra.mxu0 0.0
  %1565 = vmatprep.subr.mxu0 0.0
  %1566 = vmatpush1.msra.mxu0 0.0
  %1567 = vmatprep.subr.mxu0 0.0
  %1568 = vmatpush1.msra.mxu0 0.0
  %1569 = vmatprep.subr.mxu0 0.0
  %1570 = vmatpush1.msra.mxu0 0.0
  %1571 = vmatprep.subr.mxu0 0.0
  %1572 = vmatpush1.msra.mxu0 0.0
  %1573 = vmatprep.subr.mxu0 0.0
  %1574 = vmatpush1.msra.mxu0 0.0
  %1575 = vmatprep.subr.mxu0 0.0
  %1576 = vmatpush1.msra.mxu0 0.0
  %1577 = vmatprep.subr.mxu0 0.0
  %1578 = vmatpush1.msra.mxu0 0.0
  %1579 = vmatprep.subr.mxu0 0.0
  %1580 = vmatpush1.msra.mxu0 0.0
  %1581 = vmatprep.subr.mxu0 0.0
  %1582 = vmatpush1.msra.mxu0 0.0
  %1583 = vmatprep.mubr.f32.mxu0 0.0
  %v1584 = vand.u32 %v1269, 4294901760
  %v1585 = vsub.f32 %v1269, %v1584
  %v1586 = vand.u32 %v1585, 4294901760
  %1587 = vmatmul.mubr.f32.gmra.mrb[0].mxu0 %v1586
  %v1588 = vpop.f32.mrb[0].mxu0
  %v1589 = vadd.f32 %v1513, %v1588
  %v1590 = vpop.f32.mrb[0].mxu0
  %1591 = vdwg.mxu0
  %1592 = vmatprep.subr.mxu0 0.0
  %v1593 = vand.u32 %v1257, 4294901760
  %v1594 = vsub.f32 %v1257, %v1593
  %v1595 = vand.u32 %v1594, 4294901760
  %1596 = vmatpush1.msra.mxu0 %v1595
  %1597 = vmatprep.subr.mxu0 0.0
  %v1598 = vand.u32 %v1258, 4294901760
  %v1599 = vsub.f32 %v1258, %v1598
  %v1600 = vand.u32 %v1599, 4294901760
  %1601 = vmatpush1.msra.mxu0 %v1600
  %1602 = vmatprep.subr.mxu0 0.0
  %v1603 = vand.u32 %v1272, 4294901760
  %v1604 = vsub.f32 %v1272, %v1603
  %v1605 = vand.u32 %v1604, 4294901760
  %1606 = vmatpush1.msra.mxu0 %v1605
  %1607 = vmatprep.subr.mxu0 0.0
  %1608 = vmatpush1.msra.mxu0 0.0
  %1609 = vmatprep.subr.mxu0 0.0
  %1610 = vmatpush1.msra.mxu0 0.0
  %1611 = vmatprep.subr.mxu0 0.0
  %1612 = vmatpush1.msra.mxu0 0.0
  %1613 = vmatprep.subr.mxu0 0.0
  %1614 = vmatpush1.msra.mxu0 0.0
  %1615 = vmatprep.subr.mxu0 0.0
  %1616 = vmatpush1.msra.mxu0 0.0
  %1617 = vmatprep.subr.mxu0 0.0
  %1618 = vmatpush1.msra.mxu0 0.0
  %1619 = vmatprep.subr.mxu0 0.0
  %1620 = vmatpush1.msra.mxu0 0.0
  %1621 = vmatprep.subr.mxu0 0.0
  %1622 = vmatpush1.msra.mxu0 0.0
  %1623 = vmatprep.subr.mxu0 0.0
  %1624 = vmatpush1.msra.mxu0 0.0
  %1625 = vmatprep.subr.mxu0 0.0
  %1626 = vmatpush1.msra.mxu0 0.0
  %1627 = vmatprep.subr.mxu0 0.0
  %1628 = vmatpush1.msra.mxu0 0.0
  %1629 = vmatprep.subr.mxu0 0.0
  %1630 = vmatpush1.msra.mxu0 0.0
  %1631 = vmatprep.subr.mxu0 0.0
  %1632 = vmatpush1.msra.mxu0 0.0
  %1633 = vmatprep.subr.mxu0 0.0
  %1634 = vmatpush1.msra.mxu0 0.0
  %1635 = vmatprep.subr.mxu0 0.0
  %1636 = vmatpush1.msra.mxu0 0.0
  %1637 = vmatprep.subr.mxu0 0.0
  %1638 = vmatpush1.msra.mxu0 0.0
  %1639 = vmatprep.subr.mxu0 0.0
  %1640 = vmatpush1.msra.mxu0 0.0
  %1641 = vmatprep.subr.mxu0 0.0
  %1642 = vmatpush1.msra.mxu0 0.0
  %1643 = vmatprep.subr.mxu0 0.0
  %1644 = vmatpush1.msra.mxu0 0.0
  %1645 = vmatprep.subr.mxu0 0.0
  %1646 = vmatpush1.msra.mxu0 0.0
  %1647 = vmatprep.subr.mxu0 0.0
  %1648 = vmatpush1.msra.mxu0 0.0
  %1649 = vmatprep.subr.mxu0 0.0
  %1650 = vmatpush1.msra.mxu0 0.0
  %1651 = vmatprep.subr.mxu0 0.0
  %1652 = vmatpush1.msra.mxu0 0.0
  %1653 = vmatprep.subr.mxu0 0.0
  %1654 = vmatpush1.msra.mxu0 0.0
  %1655 = vmatprep.subr.mxu0 0.0
  %1656 = vmatpush1.msra.mxu0 0.0
  %1657 = vmatprep.subr.mxu0 0.0
  %1658 = vmatpush1.msra.mxu0 0.0
  %1659 = vmatprep.subr.mxu0 0.0
  %1660 = vmatpush1.msra.mxu0 0.0
  %1661 = vmatprep.subr.mxu0 0.0
  %1662 = vmatpush1.msra.mxu0 0.0
  %1663 = vmatprep.subr.mxu0 0.0
  %1664 = vmatpush1.msra.mxu0 0.0
  %1665 = vmatprep.mubr.f32.mxu0 0.0
  %v1666 = vand.u32 %v1269, 4294901760
  %1667 = vmatmul.mubr.f32.gmra.mrb[0].mxu0 %v1666
  %v1668 = vpop.f32.mrb[0].mxu0
  %v1669 = vadd.f32 %v1589, %v1668
  %v1670 = vpop.f32.mrb[0].mxu0
  %1671 = vdwg.mxu0
  %1672 = vmatprep.subr.mxu0 0.0
  %v1673 = vand.u32 %v1257, 4294901760
  %1674 = vmatpush1.msra.mxu0 %v1673
  %1675 = vmatprep.subr.mxu0 0.0
  %v1676 = vand.u32 %v1258, 4294901760
  %1677 = vmatpush1.msra.mxu0 %v1676
  %1678 = vmatprep.subr.mxu0 0.0
  %v1679 = vand.u32 %v1272, 4294901760
  %1680 = vmatpush1.msra.mxu0 %v1679
  %1681 = vmatprep.subr.mxu0 0.0
  %1682 = vmatpush1.msra.mxu0 0.0
  %1683 = vmatprep.subr.mxu0 0.0
  %1684 = vmatpush1.msra.mxu0 0.0
  %1685 = vmatprep.subr.mxu0 0.0
  %1686 = vmatpush1.msra.mxu0 0.0
  %1687 = vmatprep.subr.mxu0 0.0
  %1688 = vmatpush1.msra.mxu0 0.0
  %1689 = vmatprep.subr.mxu0 0.0
  %1690 = vmatpush1.msra.mxu0 0.0
  %1691 = vmatprep.subr.mxu0 0.0
  %1692 = vmatpush1.msra.mxu0 0.0
  %1693 = vmatprep.subr.mxu0 0.0
  %1694 = vmatpush1.msra.mxu0 0.0
  %1695 = vmatprep.subr.mxu0 0.0
  %1696 = vmatpush1.msra.mxu0 0.0
  %1697 = vmatprep.subr.mxu0 0.0
  %1698 = vmatpush1.msra.mxu0 0.0
  %1699 = vmatprep.subr.mxu0 0.0
  %1700 = vmatpush1.msra.mxu0 0.0
  %1701 = vmatprep.subr.mxu0 0.0
  %1702 = vmatpush1.msra.mxu0 0.0
  %1703 = vmatprep.subr.mxu0 0.0
  %1704 = vmatpush1.msra.mxu0 0.0
  %1705 = vmatprep.subr.mxu0 0.0
  %1706 = vmatpush1.msra.mxu0 0.0
  %1707 = vmatprep.subr.mxu0 0.0
  %1708 = vmatpush1.msra.mxu0 0.0
  %1709 = vmatprep.subr.mxu0 0.0
  %1710 = vmatpush1.msra.mxu0 0.0
  %1711 = vmatprep.subr.mxu0 0.0
  %1712 = vmatpush1.msra.mxu0 0.0
  %1713 = vmatprep.subr.mxu0 0.0
  %1714 = vmatpush1.msra.mxu0 0.0
  %1715 = vmatprep.subr.mxu0 0.0
  %1716 = vmatpush1.msra.mxu0 0.0
  %1717 = vmatprep.subr.mxu0 0.0
  %1718 = vmatpush1.msra.mxu0 0.0
  %1719 = vmatprep.subr.mxu0 0.0
  %1720 = vmatpush1.msra.mxu0 0.0
  %1721 = vmatprep.subr.mxu0 0.0
  %1722 = vmatpush1.msra.mxu0 0.0
  %1723 = vmatprep.subr.mxu0 0.0
  %1724 = vmatpush1.msra.mxu0 0.0
  %1725 = vmatprep.subr.mxu0 0.0
  %1726 = vmatpush1.msra.mxu0 0.0
  %1727 = vmatprep.subr.mxu0 0.0
  %1728 = vmatpush1.msra.mxu0 0.0
  %1729 = vmatprep.subr.mxu0 0.0
  %1730 = vmatpush1.msra.mxu0 0.0
  %1731 = vmatprep.subr.mxu0 0.0
  %1732 = vmatpush1.msra.mxu0 0.0
  %1733 = vmatprep.subr.mxu0 0.0
  %1734 = vmatpush1.msra.mxu0 0.0
  %1735 = vmatprep.subr.mxu0 0.0
  %1736 = vmatpush1.msra.mxu0 0.0
  %1737 = vmatprep.subr.mxu0 0.0
  %1738 = vmatpush1.msra.mxu0 0.0
  %1739 = vmatprep.mubr.f32.mxu0 0.0
  %v1740 = vand.u32 %v1269, 4294901760
  %1741 = vmatmul.mubr.f32.gmra.mrb[0].mxu0 %v1740
  %v1742 = vpop.f32.mrb[0].mxu0
  %v1743 = vadd.f32 %v1669, %v1742
  %v1744 = vpop.f32.mrb[0].mxu0
  %1745 = vdwg.mxu0
  %1746 = vst [vmem:[%s7] sm:$0x3] %v1743
  // Predicated region
  $region30: #{titanic_forward.1} parent=0 // pred_check
    _
  $region31: #{titanic_forward.1} parent=0 // pred_check_branch
    %1748 = sbr.rel (0) target = $region33
  $region32: #{titanic_forward.1} parent=0 // pred_region
    _
  $region33: #{titanic_forward.1} parent=0 // pred_fallthru
    _
  // Predicated region
  $region34: #{titanic_forward.1} parent=0 // pred_check
    _
  $region35: #{titanic_forward.1} parent=0 // pred_check_branch
    %1750 = sbr.rel (0) target = $region37
  $region36: #{titanic_forward.1} parent=0 // pred_region
    _
  $region37: #{titanic_forward.1} parent=0 // pred_fallthru
    _

</llo_original>
